<compile_context>
chip_gen: v7x
topology: tpu7x:2x2x1
jax: 0.10.0
libtpu: 0.0.40
codegen_flags: <defaults>
</compile_context>

<pallas_src>
import jax
import jax.numpy as jnp
from jax.experimental import pallas as pl
from jax.experimental.pallas import tpu as pltpu


# ----------------------- centered orthonormal FFT (reference only) ----------
def fft2c(x):
    x = jnp.fft.ifftshift(x, axes=(-2, -1))
    x = jnp.fft.fft2(x, axes=(-2, -1), norm="ortho")
    return jnp.fft.fftshift(x, axes=(-2, -1))


def ifft2c(x):
    x = jnp.fft.ifftshift(x, axes=(-2, -1))
    x = jnp.fft.ifft2(x, axes=(-2, -1), norm="ortho")
    return jnp.fft.fftshift(x, axes=(-2, -1))


# --------------------- DFT operators as (H*W, H*W) matrices -----------------
def _centered_dft_matrix(n, inverse=False):
    """1-D centered orthonormal (I)DFT as an (n, n) complex64 matrix."""
    eye = jnp.eye(n, dtype=jnp.complex64)
    shifted = jnp.fft.ifftshift(eye, axes=0)
    tf = (jnp.fft.ifft if inverse else jnp.fft.fft)(shifted, axis=0, norm="ortho")
    return jnp.fft.fftshift(tf, axes=0)


def _kron_dft_mats(h, w):
    """Matrices M s.t. rows(X_flat) @ M == flattened fft2c / ifft2c of X."""
    fh = _centered_dft_matrix(h)
    fw = _centered_dft_matrix(w)
    bh = _centered_dft_matrix(h, inverse=True)
    bw = _centered_dft_matrix(w, inverse=True)
    # vec_row(Fh @ X @ Fw^T) = vec_row(X) @ kron(Fh, Fw)^T
    mf = jnp.kron(fh, fw).T
    mb = jnp.kron(bh, bw).T
    f32 = jnp.float32
    return (jnp.real(mf).astype(f32), jnp.imag(mf).astype(f32),
            jnp.real(mb).astype(f32), jnp.imag(mb).astype(f32))


# ------------------------------ fused Pallas kernel --------------------------
def _irb_fused_kernel(scal_ref,                       # SMEM (8,)  f32
                      ir_ref, ii_ref, m_ref,          # (BD, HW)   f32
                      sr_ref, si_ref, ur_ref, ui_ref, # (Nc*BD, HW) f32 (coil-major)
                      fr_ref, fi_ref, br_ref, bi_ref, # (HW, HW)   f32 DFT mats
                      or_ref, oi_ref):                # (BD, HW)   f32
    bd, hw = ir_ref.shape
    nc = sr_ref.shape[0] // bd

    stepsize = scal_ref[0]
    scale = scal_ref[1]
    w00, w01, w10, w11 = scal_ref[2], scal_ref[3], scal_ref[4], scal_ref[5]
    b0, b1 = scal_ref[6], scal_ref[7]

    ir = ir_ref[...]
    ii = ii_ref[...]
    m = m_ref[...]

    # TODO(synk): the real SwinUNet3D regularizer is an external module not
    # provided in model/model.py; this per-pixel 2->2 linear map is a
    # deterministic stand-in so `scale * output_SwinTransformer3D` flows.
    gr = w00 * ir + w01 * ii + b0
    gi = w10 * ir + w11 * ii + b1

    sr = sr_ref[...]
    si = si_ref[...]
    ur = ur_ref[...]
    ui = ui_ref[...]

    # Broadcast image / mask over coils (coil-major row blocks of size BD).
    irb = jnp.concatenate([ir] * nc, axis=0)
    iib = jnp.concatenate([ii] * nc, axis=0)
    mb = jnp.concatenate([m] * nc, axis=0)

    # sens_expand: coil_img = img * sens   (complex multiply)
    cr = irb * sr - iib * si
    ci = irb * si + iib * sr

    fr = fr_ref[...]
    fi = fi_ref[...]
    # fft2c on flattened pixels: one lane-dense (Nc*BD, HW) @ (HW, HW) complex matmul
    kr = (jnp.dot(cr, fr, preferred_element_type=jnp.float32)
          - jnp.dot(ci, fi, preferred_element_type=jnp.float32))
    ki = (jnp.dot(cr, fi, preferred_element_type=jnp.float32)
          + jnp.dot(ci, fr, preferred_element_type=jnp.float32))

    # data-consistency residual: r = mask * (mask * k - k_undersampled)
    rr = mb * (mb * kr - ur)
    ri = mb * (mb * ki - ui)

    br = br_ref[...]
    bi = bi_ref[...]
    # ifft2c on flattened pixels
    xr = (jnp.dot(rr, br, preferred_element_type=jnp.float32)
          - jnp.dot(ri, bi, preferred_element_type=jnp.float32))
    xi = (jnp.dot(rr, bi, preferred_element_type=jnp.float32)
          + jnp.dot(ri, br, preferred_element_type=jnp.float32))

    # sens_reduce: sum_c x_c * conj(sens_c)   (in-kernel coil reduction,
    # static tile-aligned row slices, unrolled over Nc)
    redr = None
    redi = None
    for c in range(nc):
        lo, hi = c * bd, (c + 1) * bd
        xrc, xic = xr[lo:hi], xi[lo:hi]
        src, sic = sr[lo:hi], si[lo:hi]
        tr = xrc * src + xic * sic
        ti = xic * src - xrc * sic
        redr = tr if redr is None else redr + tr
        redi = ti if redi is None else redi + ti

    # gradient-descent update (swin stand-in fused here)
    or_ref[...] = ir - stepsize * (2.0 * redr + scale * gr)
    oi_ref[...] = ii - stepsize * (2.0 * redi + scale * gi)


# ------------------------------ host wrapper ---------------------------------
def irb_forward(target_kspace_u, target_img_f, mask, sens_maps_updated,
                idx, gate, stepsize, *, scale, swin_w, swin_b):
    """IRB.forward.

    target_kspace_u : (B, Nc, D, H, W) complex64   undersampled k-space
    target_img_f    : (B, 1,  D, H, W) complex64   current image estimate
    mask            : (B, 1,  D, H, W) float32     sampling mask
    sens_maps       : (B, Nc, D, H, W) complex64   coil sensitivities
    """
    del idx, gate  # unused in the reference forward as well
    f32 = jnp.float32
    B, Nc, D, H, W = target_kspace_u.shape
    BD, HW = B * D, H * W

    # complex -> separate real/imag, lane-dense flattening (H, W) -> H*W
    ir = jnp.real(target_img_f).reshape(BD, HW).astype(f32)
    ii = jnp.imag(target_img_f).reshape(BD, HW).astype(f32)
    m = mask.astype(f32).reshape(BD, HW)

    def coil_major(x):  # (B, Nc, D, H, W) -> (Nc*B*D, H*W), coil outermost
        return jnp.transpose(x, (1, 0, 2, 3, 4)).reshape(Nc * BD, HW)

    sens_cm = coil_major(sens_maps_updated)
    ksp_cm = coil_major(target_kspace_u)
    sr = jnp.real(sens_cm).astype(f32)
    si = jnp.imag(sens_cm).astype(f32)
    ur = jnp.real(ksp_cm).astype(f32)
    ui = jnp.imag(ksp_cm).astype(f32)

    fr, fi, br, bi = _kron_dft_mats(H, W)

    scalars = jnp.concatenate([
        jnp.stack([jnp.asarray(stepsize, f32), jnp.asarray(scale, f32)]),
        jnp.asarray(swin_w, f32).reshape(-1),
        jnp.asarray(swin_b, f32).reshape(-1),
    ])  # (8,)

    smem = pl.BlockSpec(memory_space=pltpu.MemorySpace.SMEM)
    vmem = pl.BlockSpec(memory_space=pltpu.MemorySpace.VMEM)

    out_r, out_i = pl.pallas_call(
        _irb_fused_kernel,
        in_specs=[smem] + [vmem] * 11,
        out_specs=(vmem, vmem),
        out_shape=(jax.ShapeDtypeStruct((BD, HW), f32),
                   jax.ShapeDtypeStruct((BD, HW), f32)),
    )(scalars, ir, ii, m, sr, si, ur, ui, fr, fi, br, bi)

    out = (out_r + 1j * out_i).astype(jnp.complex64)
    return out.reshape(B, 1, D, H, W)


# ------------------------------ pure-JAX reference ---------------------------
def _reference(kspace_u, img, mask, sens, stepsize, scale, w, b):
    xr = jnp.real(img)
    xi = jnp.imag(img)
    swin = (w[0, 0] * xr + w[0, 1] * xi + b[0]) + 1j * (
        w[1, 0] * xr + w[1, 1] * xi + b[1])
    k = fft2c(img * sens)                                           # sens_expand
    r = mask * (mask * k - kspace_u)                                # DC residual
    red = jnp.sum(ifft2c(r) * jnp.conj(sens), axis=1, keepdims=True)  # sens_reduce
    return img - stepsize * (2.0 * red + scale * swin)


# ---------------------------------- main --------------------------------------
if __name__ == "__main__":
    B, Nc, D, H, W = 2, 4, 4, 16, 16  # coils_all = 4

    key = jax.random.PRNGKey(0)
    k1, k2, k3, k4 = jax.random.split(key, 4)

    def crandn(k, shape):
        ka, kb = jax.random.split(k)
        return (jax.random.normal(ka, shape, jnp.float32)
                + 1j * jax.random.normal(kb, shape, jnp.float32)).astype(jnp.complex64)

    target_img_f = crandn(k1, (B, 1, D, H, W))
    sens_maps = crandn(k2, (B, Nc, D, H, W))
    target_kspace_u = crandn(k3, (B, Nc, D, H, W))
    mask = (jax.random.uniform(k4, (B, 1, D, H, W)) < 0.5).astype(jnp.float32)

    stepsize = jnp.float32(0.05)
    scale = 0.1
    # deterministic stand-in regularizer parameters
    swin_w = jnp.array([[0.9, -0.1], [0.1, 0.9]], jnp.float32)
    swin_b = jnp.array([0.01, -0.01], jnp.float32)
    idx = 0
    gate = jnp.float32(1.0)

    out = irb_forward(target_kspace_u, target_img_f, mask, sens_maps,
                      idx, gate, stepsize,
                      scale=scale, swin_w=swin_w, swin_b=swin_b)
    out = jax.block_until_ready(out)

    ref = _reference(target_kspace_u, target_img_f, mask, sens_maps,
                     stepsize, scale, swin_w, swin_b)
    ref = jax.block_until_ready(ref)

    assert out.shape == (B, 1, D, H, W) and out.dtype == jnp.complex64
    assert jnp.allclose(out, ref, atol=1e-2, rtol=1e-2), "mismatch vs reference"
    print("KERNEL_OK")
</pallas_src>

<mosaic_0001>
module attributes {stable_mosaic.version = 11 : i64} {
  func.func @_irb_fused_kernel(%arg0: memref<8xf32, #tpu.memory_space<smem>>, %arg1: memref<8x256xf32, #tpu.memory_space<vmem>>, %arg2: memref<8x256xf32, #tpu.memory_space<vmem>>, %arg3: memref<8x256xf32, #tpu.memory_space<vmem>>, %arg4: memref<32x256xf32, #tpu.memory_space<vmem>>, %arg5: memref<32x256xf32, #tpu.memory_space<vmem>>, %arg6: memref<32x256xf32, #tpu.memory_space<vmem>>, %arg7: memref<32x256xf32, #tpu.memory_space<vmem>>, %arg8: memref<256x256xf32, #tpu.memory_space<vmem>>, %arg9: memref<256x256xf32, #tpu.memory_space<vmem>>, %arg10: memref<256x256xf32, #tpu.memory_space<vmem>>, %arg11: memref<256x256xf32, #tpu.memory_space<vmem>>, %arg12: memref<8x256xf32, #tpu.memory_space<vmem>>, %arg13: memref<8x256xf32, #tpu.memory_space<vmem>>) attributes {dimension_semantics = [], scalar_prefetch = 0 : i64, scratch_operands = 0 : i64, tpu.core_type = #tpu.core_type<tc>} {
    %c0 = arith.constant 0 : index
    %0 = memref.load %arg0[%c0] : memref<8xf32, #tpu.memory_space<smem>>
    %c1 = arith.constant 1 : index
    %1 = memref.load %arg0[%c1] : memref<8xf32, #tpu.memory_space<smem>>
    %c2 = arith.constant 2 : index
    %2 = memref.load %arg0[%c2] : memref<8xf32, #tpu.memory_space<smem>>
    %c3 = arith.constant 3 : index
    %3 = memref.load %arg0[%c3] : memref<8xf32, #tpu.memory_space<smem>>
    %c4 = arith.constant 4 : index
    %4 = memref.load %arg0[%c4] : memref<8xf32, #tpu.memory_space<smem>>
    %c5 = arith.constant 5 : index
    %5 = memref.load %arg0[%c5] : memref<8xf32, #tpu.memory_space<smem>>
    %c6 = arith.constant 6 : index
    %6 = memref.load %arg0[%c6] : memref<8xf32, #tpu.memory_space<smem>>
    %c7 = arith.constant 7 : index
    %7 = memref.load %arg0[%c7] : memref<8xf32, #tpu.memory_space<smem>>
    %c0_0 = arith.constant 0 : index
    %c0_1 = arith.constant 0 : index
    %8 = vector.load %arg1[%c0_0, %c0_1] : memref<8x256xf32, #tpu.memory_space<vmem>>, vector<8x256xf32>
    %c0_2 = arith.constant 0 : index
    %c0_3 = arith.constant 0 : index
    %9 = vector.load %arg2[%c0_2, %c0_3] : memref<8x256xf32, #tpu.memory_space<vmem>>, vector<8x256xf32>
    %c0_4 = arith.constant 0 : index
    %c0_5 = arith.constant 0 : index
    %10 = vector.load %arg3[%c0_4, %c0_5] : memref<8x256xf32, #tpu.memory_space<vmem>>, vector<8x256xf32>
    %11 = vector.broadcast %2 : f32 to vector<8x256xf32>
    %12 = arith.mulf %11, %8 : vector<8x256xf32>
    %13 = vector.broadcast %3 : f32 to vector<8x256xf32>
    %14 = arith.mulf %13, %9 : vector<8x256xf32>
    %15 = arith.addf %12, %14 : vector<8x256xf32>
    %16 = vector.broadcast %6 : f32 to vector<8x256xf32>
    %17 = arith.addf %15, %16 : vector<8x256xf32>
    %18 = vector.broadcast %4 : f32 to vector<8x256xf32>
    %19 = arith.mulf %18, %8 : vector<8x256xf32>
    %20 = vector.broadcast %5 : f32 to vector<8x256xf32>
    %21 = arith.mulf %20, %9 : vector<8x256xf32>
    %22 = arith.addf %19, %21 : vector<8x256xf32>
    %23 = vector.broadcast %7 : f32 to vector<8x256xf32>
    %24 = arith.addf %22, %23 : vector<8x256xf32>
    %c0_6 = arith.constant 0 : index
    %c0_7 = arith.constant 0 : index
    %25 = vector.load %arg4[%c0_6, %c0_7] : memref<32x256xf32, #tpu.memory_space<vmem>>, vector<32x256xf32>
    %c0_8 = arith.constant 0 : index
    %c0_9 = arith.constant 0 : index
    %26 = vector.load %arg5[%c0_8, %c0_9] : memref<32x256xf32, #tpu.memory_space<vmem>>, vector<32x256xf32>
    %c0_10 = arith.constant 0 : index
    %c0_11 = arith.constant 0 : index
    %27 = vector.load %arg6[%c0_10, %c0_11] : memref<32x256xf32, #tpu.memory_space<vmem>>, vector<32x256xf32>
    %c0_12 = arith.constant 0 : index
    %c0_13 = arith.constant 0 : index
    %28 = vector.load %arg7[%c0_12, %c0_13] : memref<32x256xf32, #tpu.memory_space<vmem>>, vector<32x256xf32>
    %29 = tpu.concatenate %8, %8, %8, %8 in 0 : vector<8x256xf32>, vector<8x256xf32>, vector<8x256xf32>, vector<8x256xf32> -> vector<32x256xf32>
    %30 = tpu.concatenate %9, %9, %9, %9 in 0 : vector<8x256xf32>, vector<8x256xf32>, vector<8x256xf32>, vector<8x256xf32> -> vector<32x256xf32>
    %31 = tpu.concatenate %10, %10, %10, %10 in 0 : vector<8x256xf32>, vector<8x256xf32>, vector<8x256xf32>, vector<8x256xf32> -> vector<32x256xf32>
    %32 = arith.mulf %29, %25 : vector<32x256xf32>
    %33 = arith.mulf %30, %26 : vector<32x256xf32>
    %34 = arith.subf %32, %33 : vector<32x256xf32>
    %35 = arith.mulf %29, %26 : vector<32x256xf32>
    %36 = arith.mulf %30, %25 : vector<32x256xf32>
    %37 = arith.addf %35, %36 : vector<32x256xf32>
    %c0_14 = arith.constant 0 : index
    %c0_15 = arith.constant 0 : index
    %38 = vector.load %arg8[%c0_14, %c0_15] : memref<256x256xf32, #tpu.memory_space<vmem>>, vector<256x256xf32>
    %c0_16 = arith.constant 0 : index
    %c0_17 = arith.constant 0 : index
    %39 = vector.load %arg9[%c0_16, %c0_17] : memref<256x256xf32, #tpu.memory_space<vmem>>, vector<256x256xf32>
    %cst = arith.constant dense<0.000000e+00> : vector<32x256xf32>
    %40 = tpu.matmul %34, %38, %cst {dimension_numbers = #tpu.dot_dimension_numbers<[1], [0], [0], [1], [0, 0, 1, 1], [], []>} : vector<32x256xf32>, vector<256x256xf32>, vector<32x256xf32> -> vector<32x256xf32>
    %cst_18 = arith.constant dense<0.000000e+00> : vector<32x256xf32>
    %41 = tpu.matmul %37, %39, %cst_18 {dimension_numbers = #tpu.dot_dimension_numbers<[1], [0], [0], [1], [0, 0, 1, 1], [], []>} : vector<32x256xf32>, vector<256x256xf32>, vector<32x256xf32> -> vector<32x256xf32>
    %42 = arith.subf %40, %41 : vector<32x256xf32>
    %cst_19 = arith.constant dense<0.000000e+00> : vector<32x256xf32>
    %43 = tpu.matmul %34, %39, %cst_19 {dimension_numbers = #tpu.dot_dimension_numbers<[1], [0], [0], [1], [0, 0, 1, 1], [], []>} : vector<32x256xf32>, vector<256x256xf32>, vector<32x256xf32> -> vector<32x256xf32>
    %cst_20 = arith.constant dense<0.000000e+00> : vector<32x256xf32>
    %44 = tpu.matmul %37, %38, %cst_20 {dimension_numbers = #tpu.dot_dimension_numbers<[1], [0], [0], [1], [0, 0, 1, 1], [], []>} : vector<32x256xf32>, vector<256x256xf32>, vector<32x256xf32> -> vector<32x256xf32>
    %45 = arith.addf %43, %44 : vector<32x256xf32>
    %46 = arith.mulf %31, %42 : vector<32x256xf32>
    %47 = arith.subf %46, %27 : vector<32x256xf32>
    %48 = arith.mulf %31, %47 : vector<32x256xf32>
    %49 = arith.mulf %31, %45 : vector<32x256xf32>
    %50 = arith.subf %49, %28 : vector<32x256xf32>
    %51 = arith.mulf %31, %50 : vector<32x256xf32>
    %c0_21 = arith.constant 0 : index
    %c0_22 = arith.constant 0 : index
    %52 = vector.load %arg10[%c0_21, %c0_22] : memref<256x256xf32, #tpu.memory_space<vmem>>, vector<256x256xf32>
    %c0_23 = arith.constant 0 : index
    %c0_24 = arith.constant 0 : index
    %53 = vector.load %arg11[%c0_23, %c0_24] : memref<256x256xf32, #tpu.memory_space<vmem>>, vector<256x256xf32>
    %cst_25 = arith.constant dense<0.000000e+00> : vector<32x256xf32>
    %54 = tpu.matmul %48, %52, %cst_25 {dimension_numbers = #tpu.dot_dimension_numbers<[1], [0], [0], [1], [0, 0, 1, 1], [], []>} : vector<32x256xf32>, vector<256x256xf32>, vector<32x256xf32> -> vector<32x256xf32>
    %cst_26 = arith.constant dense<0.000000e+00> : vector<32x256xf32>
    %55 = tpu.matmul %51, %53, %cst_26 {dimension_numbers = #tpu.dot_dimension_numbers<[1], [0], [0], [1], [0, 0, 1, 1], [], []>} : vector<32x256xf32>, vector<256x256xf32>, vector<32x256xf32> -> vector<32x256xf32>
    %56 = arith.subf %54, %55 : vector<32x256xf32>
    %cst_27 = arith.constant dense<0.000000e+00> : vector<32x256xf32>
    %57 = tpu.matmul %48, %53, %cst_27 {dimension_numbers = #tpu.dot_dimension_numbers<[1], [0], [0], [1], [0, 0, 1, 1], [], []>} : vector<32x256xf32>, vector<256x256xf32>, vector<32x256xf32> -> vector<32x256xf32>
    %cst_28 = arith.constant dense<0.000000e+00> : vector<32x256xf32>
    %58 = tpu.matmul %51, %52, %cst_28 {dimension_numbers = #tpu.dot_dimension_numbers<[1], [0], [0], [1], [0, 0, 1, 1], [], []>} : vector<32x256xf32>, vector<256x256xf32>, vector<32x256xf32> -> vector<32x256xf32>
    %59 = arith.addf %57, %58 : vector<32x256xf32>
    %60 = vector.extract_strided_slice %56 {offsets = [0, 0], sizes = [8, 256], strides = [1, 1]} : vector<32x256xf32> to vector<8x256xf32>
    %61 = vector.extract_strided_slice %59 {offsets = [0, 0], sizes = [8, 256], strides = [1, 1]} : vector<32x256xf32> to vector<8x256xf32>
    %62 = vector.extract_strided_slice %25 {offsets = [0, 0], sizes = [8, 256], strides = [1, 1]} : vector<32x256xf32> to vector<8x256xf32>
    %63 = vector.extract_strided_slice %26 {offsets = [0, 0], sizes = [8, 256], strides = [1, 1]} : vector<32x256xf32> to vector<8x256xf32>
    %64 = arith.mulf %60, %62 : vector<8x256xf32>
    %65 = arith.mulf %61, %63 : vector<8x256xf32>
    %66 = arith.addf %64, %65 : vector<8x256xf32>
    %67 = arith.mulf %61, %62 : vector<8x256xf32>
    %68 = arith.mulf %60, %63 : vector<8x256xf32>
    %69 = arith.subf %67, %68 : vector<8x256xf32>
    %70 = vector.extract_strided_slice %56 {offsets = [8, 0], sizes = [8, 256], strides = [1, 1]} : vector<32x256xf32> to vector<8x256xf32>
    %71 = vector.extract_strided_slice %59 {offsets = [8, 0], sizes = [8, 256], strides = [1, 1]} : vector<32x256xf32> to vector<8x256xf32>
    %72 = vector.extract_strided_slice %25 {offsets = [8, 0], sizes = [8, 256], strides = [1, 1]} : vector<32x256xf32> to vector<8x256xf32>
    %73 = vector.extract_strided_slice %26 {offsets = [8, 0], sizes = [8, 256], strides = [1, 1]} : vector<32x256xf32> to vector<8x256xf32>
    %74 = arith.mulf %70, %72 : vector<8x256xf32>
    %75 = arith.mulf %71, %73 : vector<8x256xf32>
    %76 = arith.addf %74, %75 : vector<8x256xf32>
    %77 = arith.mulf %71, %72 : vector<8x256xf32>
    %78 = arith.mulf %70, %73 : vector<8x256xf32>
    %79 = arith.subf %77, %78 : vector<8x256xf32>
    %80 = arith.addf %66, %76 : vector<8x256xf32>
    %81 = arith.addf %69, %79 : vector<8x256xf32>
    %82 = vector.extract_strided_slice %56 {offsets = [16, 0], sizes = [8, 256], strides = [1, 1]} : vector<32x256xf32> to vector<8x256xf32>
    %83 = vector.extract_strided_slice %59 {offsets = [16, 0], sizes = [8, 256], strides = [1, 1]} : vector<32x256xf32> to vector<8x256xf32>
    %84 = vector.extract_strided_slice %25 {offsets = [16, 0], sizes = [8, 256], strides = [1, 1]} : vector<32x256xf32> to vector<8x256xf32>
    %85 = vector.extract_strided_slice %26 {offsets = [16, 0], sizes = [8, 256], strides = [1, 1]} : vector<32x256xf32> to vector<8x256xf32>
    %86 = arith.mulf %82, %84 : vector<8x256xf32>
    %87 = arith.mulf %83, %85 : vector<8x256xf32>
    %88 = arith.addf %86, %87 : vector<8x256xf32>
    %89 = arith.mulf %83, %84 : vector<8x256xf32>
    %90 = arith.mulf %82, %85 : vector<8x256xf32>
    %91 = arith.subf %89, %90 : vector<8x256xf32>
    %92 = arith.addf %80, %88 : vector<8x256xf32>
    %93 = arith.addf %81, %91 : vector<8x256xf32>
    %94 = vector.extract_strided_slice %56 {offsets = [24, 0], sizes = [8, 256], strides = [1, 1]} : vector<32x256xf32> to vector<8x256xf32>
    %95 = vector.extract_strided_slice %59 {offsets = [24, 0], sizes = [8, 256], strides = [1, 1]} : vector<32x256xf32> to vector<8x256xf32>
    %96 = vector.extract_strided_slice %25 {offsets = [24, 0], sizes = [8, 256], strides = [1, 1]} : vector<32x256xf32> to vector<8x256xf32>
    %97 = vector.extract_strided_slice %26 {offsets = [24, 0], sizes = [8, 256], strides = [1, 1]} : vector<32x256xf32> to vector<8x256xf32>
    %98 = arith.mulf %94, %96 : vector<8x256xf32>
    %99 = arith.mulf %95, %97 : vector<8x256xf32>
    %100 = arith.addf %98, %99 : vector<8x256xf32>
    %101 = arith.mulf %95, %96 : vector<8x256xf32>
    %102 = arith.mulf %94, %97 : vector<8x256xf32>
    %103 = arith.subf %101, %102 : vector<8x256xf32>
    %104 = arith.addf %92, %100 : vector<8x256xf32>
    %105 = arith.addf %93, %103 : vector<8x256xf32>
    %cst_29 = arith.constant 2.000000e+00 : f32
    %106 = vector.broadcast %cst_29 : f32 to vector<8x256xf32>
    %107 = arith.mulf %106, %104 : vector<8x256xf32>
    %108 = vector.broadcast %1 : f32 to vector<8x256xf32>
    %109 = arith.mulf %108, %17 : vector<8x256xf32>
    %110 = arith.addf %107, %109 : vector<8x256xf32>
    %111 = vector.broadcast %0 : f32 to vector<8x256xf32>
    %112 = arith.mulf %111, %110 : vector<8x256xf32>
    %113 = arith.subf %8, %112 : vector<8x256xf32>
    %c0_30 = arith.constant 0 : index
    %c0_31 = arith.constant 0 : index
    %114 = vector.load %arg12[%c0_30, %c0_31] : memref<8x256xf32, #tpu.memory_space<vmem>>, vector<8x256xf32>
    tpu.vector_store %arg12[%c0_30, %c0_31], %113 {strides = array<i32>} : memref<8x256xf32, #tpu.memory_space<vmem>>, vector<8x256xf32>,
    %cst_32 = arith.constant 2.000000e+00 : f32
    %115 = vector.broadcast %cst_32 : f32 to vector<8x256xf32>
    %116 = arith.mulf %115, %105 : vector<8x256xf32>
    %117 = vector.broadcast %1 : f32 to vector<8x256xf32>
    %118 = arith.mulf %117, %24 : vector<8x256xf32>
    %119 = arith.addf %116, %118 : vector<8x256xf32>
    %120 = vector.broadcast %0 : f32 to vector<8x256xf32>
    %121 = arith.mulf %120, %119 : vector<8x256xf32>
    %122 = arith.subf %9, %121 : vector<8x256xf32>
    %c0_33 = arith.constant 0 : index
    %c0_34 = arith.constant 0 : index
    %123 = vector.load %arg13[%c0_33, %c0_34] : memref<8x256xf32, #tpu.memory_space<vmem>>, vector<8x256xf32>
    tpu.vector_store %arg13[%c0_33, %c0_34], %122 {strides = array<i32>} : memref<8x256xf32, #tpu.memory_space<vmem>>, vector<8x256xf32>,
    return
  }
}

</mosaic_0001>

<llo_original>
// kernel: tpu_custom_call.1
$region0: #{tpu_custom_call.1}
  #allocation0 [shape = 'u32[]', space=smem, size = 0x4, offset = 0x4, fixed_abs, tag = 'smem constant byte address 0x4 - core index']
  #allocation1 [shape = 'u32[144,128]{1,0:T(1,128)}', space=vmem, size = 0x12000, scoped, tag = 'internal scratch']
  %s0 = inlined_call_operand.hbm [shape: f32[8], index: 0, kind: input, shape index: {}]
  %s1 = inlined_call_operand.hbm [shape: f32[8,256], index: 1, kind: input, shape index: {}]
  %s2 = inlined_call_operand.hbm [shape: f32[8,256], index: 2, kind: input, shape index: {}]
  %s3 = inlined_call_operand.hbm [shape: f32[8,256], index: 3, kind: input, shape index: {}]
  %s4 = inlined_call_operand.hbm [shape: f32[32,256], index: 4, kind: input, shape index: {}]
  %s5 = inlined_call_operand.hbm [shape: f32[32,256], index: 5, kind: input, shape index: {}]
  %s6 = inlined_call_operand.hbm [shape: f32[32,256], index: 6, kind: input, shape index: {}]
  %s7 = inlined_call_operand.hbm [shape: f32[32,256], index: 7, kind: input, shape index: {}]
  %s8 = inlined_call_operand.hbm [shape: f32[256,256], index: 8, kind: input, shape index: {}]
  %s9 = inlined_call_operand.hbm [shape: f32[256,256], index: 9, kind: input, shape index: {}]
  %s10 = inlined_call_operand.hbm [shape: f32[256,256], index: 10, kind: input, shape index: {}]
  %s11 = inlined_call_operand.hbm [shape: f32[256,256], index: 11, kind: input, shape index: {}]
  %s12 = inlined_call_operand.hbm [shape: f32[8,256], index: 12, kind: output, shape index: {0}]
  %s13 = inlined_call_operand.hbm [shape: f32[8,256], index: 13, kind: output, shape index: {1}]
  %14 = xla_tuple %s12, %s13
  %s15 = sld [smem:[#allocation0]]
  $region114: #{tpu_custom_call.1} parent=0
    _
  %s17 = ssub.s32 1, %s15
  %s18 = scalar_select 0, %s17, %s15
  $region1: #{tpu_custom_call.1} parent=0
    #allocation2 [shape = 'u8[512]{0}', space=smem, size = 0x200, scoped, tag = 'input window, operand 0, single buffered']
    #allocation3 [shape = 's32[1]{0}', space=sflag, size = 0x4, scoped, tag = 'scoped memory for tpu_custom_call.1']
    #allocation4 [shape = 's32[1]{0}', space=sflag, size = 0x4, scoped, tag = 'scoped memory for tpu_custom_call.1']
    #allocation5 [shape = 's32[1]{0}', space=sflag, size = 0x4, scoped, tag = 'scoped memory for tpu_custom_call.1']
    #allocation6 [shape = 'u8[8192]{0}', space=vmem, size = 0x2000, scoped, tag = 'input window, operand 1, single buffered']
    #allocation7 [shape = 'u8[8192]{0}', space=vmem, size = 0x2000, scoped, tag = 'input window, operand 2, single buffered']
    #allocation8 [shape = 's32[1]{0}', space=sflag, size = 0x4, scoped, tag = 'scoped memory for tpu_custom_call.1']
    #allocation9 [shape = 'u8[8192]{0}', space=vmem, size = 0x2000, scoped, tag = 'input window, operand 3, single buffered']
    #allocation10 [shape = 'u8[32768]{0}', space=vmem, size = 0x8000, scoped, tag = 'input window, operand 4, single buffered']
    #allocation11 [shape = 's32[1]{0}', space=sflag, size = 0x4, scoped, tag = 'scoped memory for tpu_custom_call.1']
    #allocation12 [shape = 'u8[32768]{0}', space=vmem, size = 0x8000, scoped, tag = 'input window, operand 5, single buffered']
    #allocation13 [shape = 'u8[32768]{0}', space=vmem, size = 0x8000, scoped, tag = 'input window, operand 6, single buffered']
    #allocation14 [shape = 's32[1]{0}', space=sflag, size = 0x4, scoped, tag = 'scoped memory for tpu_custom_call.1']
    #allocation15 [shape = 'u8[32768]{0}', space=vmem, size = 0x8000, scoped, tag = 'input window, operand 7, single buffered']
    #allocation16 [shape = 'u8[262144]{0}', space=vmem, size = 0x40000, scoped, tag = 'input window, operand 8, single buffered']
    #allocation17 [shape = 's32[1]{0}', space=sflag, size = 0x4, scoped, tag = 'scoped memory for tpu_custom_call.1']
    #allocation18 [shape = 'u8[262144]{0}', space=vmem, size = 0x40000, scoped, tag = 'input window, operand 9, single buffered']
    #allocation19 [shape = 'u8[262144]{0}', space=vmem, size = 0x40000, scoped, tag = 'input window, operand 10, single buffered']
    #allocation20 [shape = 's32[1]{0}', space=sflag, size = 0x4, scoped, tag = 'scoped memory for tpu_custom_call.1']
    #allocation21 [shape = 'u8[262144]{0}', space=vmem, size = 0x40000, scoped, tag = 'input window, operand 11, single buffered']
    #allocation22 [shape = 'u8[8192]{0}', space=vmem, size = 0x2000, scoped, tag = 'output window, operand 0, single buffered']
    #allocation23 [shape = 'u8[8192]{0}', space=vmem, size = 0x2000, scoped, tag = 'output window, operand 1, single buffered']
    #allocation24 [shape = 's32[1]{0}', space=sflag, size = 0x4, scoped, tag = 'scoped memory for tpu_custom_call.1']
    %19 = vsyncpa [#allocation5], 0
    %20 = vsyncpa [#allocation3], 0
    %21 = vsyncpa [#allocation8], 0
    %22 = vsyncpa [#allocation11], 0
    %23 = vsyncpa [#allocation14], 0
    %24 = vsyncpa [#allocation17], 0
    %25 = vsyncpa [#allocation20], 0
    %26 = vsyncpa [#allocation4], 0
    %27 = vsyncpa [#allocation24], 0
    // Predicated region
    $region2: #{tpu_custom_call.1} parent=1 // pred_check
      _
    $region3: #{tpu_custom_call.1} parent=1 // pred_check_branch
      %29 = sbr.rel (0) target = $region5
    $region4: #{tpu_custom_call.1} parent=1 // pred_region
      %s31 = ssub.s32 16, 16
      %32 = vsyncadd [#allocation5], %s31
      %35 = dma.hbm_to_smem %s0, 16, [#allocation2], [#allocation5]
    $region5: #{tpu_custom_call.1} parent=1 // pred_fallthru
      _
    // Predicated region
    $region6: #{tpu_custom_call.1} parent=1 // pred_check
      _
    $region7: #{tpu_custom_call.1} parent=1 // pred_check_branch
      %37 = sbr.rel (0) target = $region9
    $region8: #{tpu_custom_call.1} parent=1 // pred_region
      %s39 = ssub.s32 256, 256
      %40 = vsyncadd [#allocation3], %s39
      %s42 = sshll.u32 [#allocation6], 4
      %s43 = int_to_ptr.vmem [resolvable:$true] %s42
      %45 = dma.hbm_to_vmem [thread:$0]  %s1, 256, %s43, [#allocation3]
    $region9: #{tpu_custom_call.1} parent=1 // pred_fallthru
      _
    // Predicated region
    $region10: #{tpu_custom_call.1} parent=1 // pred_check
      _
    $region11: #{tpu_custom_call.1} parent=1 // pred_check_branch
      %47 = sbr.rel (0) target = $region13
    $region12: #{tpu_custom_call.1} parent=1 // pred_region
      %s49 = ssub.s32 256, 256
      %50 = vsyncadd [#allocation8], %s49
      %s52 = sshll.u32 [#allocation7], 4
      %s53 = int_to_ptr.vmem [resolvable:$true] %s52
      %55 = dma.hbm_to_vmem [thread:$0]  %s2, 256, %s53, [#allocation8]
    $region13: #{tpu_custom_call.1} parent=1 // pred_fallthru
      _
    // Predicated region
    $region14: #{tpu_custom_call.1} parent=1 // pred_check
      _
    $region15: #{tpu_custom_call.1} parent=1 // pred_check_branch
      %57 = sbr.rel (0) target = $region17
    $region16: #{tpu_custom_call.1} parent=1 // pred_region
      %s59 = ssub.s32 256, 256
      %60 = vsyncadd [#allocation8], %s59
      %s62 = sshll.u32 [#allocation9], 4
      %s63 = int_to_ptr.vmem [resolvable:$true] %s62
      %65 = dma.hbm_to_vmem [thread:$0]  %s3, 256, %s63, [#allocation8]
    $region17: #{tpu_custom_call.1} parent=1 // pred_fallthru
      _
    // Predicated region
    $region18: #{tpu_custom_call.1} parent=1 // pred_check
      _
    $region19: #{tpu_custom_call.1} parent=1 // pred_check_branch
      %67 = sbr.rel (0) target = $region21
    $region20: #{tpu_custom_call.1} parent=1 // pred_region
      %s69 = ssub.s32 1024, 1024
      %70 = vsyncadd [#allocation11], %s69
      %s71 = sshll.u32 [#allocation10], 4
      %s72 = int_to_ptr.vmem [resolvable:$true] %s71
      %77 = dma.hbm_to_vmem [thread:$0]  %s4, 1024, %s72, [#allocation11], 256, 256, 16
    $region21: #{tpu_custom_call.1} parent=1 // pred_fallthru
      _
    // Predicated region
    $region22: #{tpu_custom_call.1} parent=1 // pred_check
      _
    $region23: #{tpu_custom_call.1} parent=1 // pred_check_branch
      %79 = sbr.rel (0) target = $region25
    $region24: #{tpu_custom_call.1} parent=1 // pred_region
      %s81 = ssub.s32 1024, 1024
      %82 = vsyncadd [#allocation11], %s81
      %s83 = sshll.u32 [#allocation12], 4
      %s84 = int_to_ptr.vmem [resolvable:$true] %s83
      %89 = dma.hbm_to_vmem [thread:$0]  %s5, 1024, %s84, [#allocation11], 256, 256, 16
    $region25: #{tpu_custom_call.1} parent=1 // pred_fallthru
      _
    // Predicated region
    $region26: #{tpu_custom_call.1} parent=1 // pred_check
      _
    $region27: #{tpu_custom_call.1} parent=1 // pred_check_branch
      %91 = sbr.rel (0) target = $region29
    $region28: #{tpu_custom_call.1} parent=1 // pred_region
      %s93 = ssub.s32 1024, 1024
      %94 = vsyncadd [#allocation14], %s93
      %s95 = sshll.u32 [#allocation13], 4
      %s96 = int_to_ptr.vmem [resolvable:$true] %s95
      %101 = dma.hbm_to_vmem [thread:$0]  %s6, 1024, %s96, [#allocation14], 256, 256, 16
    $region29: #{tpu_custom_call.1} parent=1 // pred_fallthru
      _
    // Predicated region
    $region30: #{tpu_custom_call.1} parent=1 // pred_check
      _
    $region31: #{tpu_custom_call.1} parent=1 // pred_check_branch
      %103 = sbr.rel (0) target = $region33
    $region32: #{tpu_custom_call.1} parent=1 // pred_region
      %s105 = ssub.s32 1024, 1024
      %106 = vsyncadd [#allocation14], %s105
      %s107 = sshll.u32 [#allocation15], 4
      %s108 = int_to_ptr.vmem [resolvable:$true] %s107
      %113 = dma.hbm_to_vmem [thread:$0]  %s7, 1024, %s108, [#allocation14], 256, 256, 16
    $region33: #{tpu_custom_call.1} parent=1 // pred_fallthru
      _
    // Predicated region
    $region34: #{tpu_custom_call.1} parent=1 // pred_check
      _
    $region35: #{tpu_custom_call.1} parent=1 // pred_check_branch
      %115 = sbr.rel (0) target = $region37
    $region36: #{tpu_custom_call.1} parent=1 // pred_region
      %s117 = ssub.s32 8192, 8192
      %118 = vsyncadd [#allocation17], %s117
      %s119 = sshll.u32 [#allocation16], 4
      %s120 = int_to_ptr.vmem [resolvable:$true] %s119
      %125 = dma.hbm_to_vmem [thread:$0]  %s8, 8192, %s120, [#allocation17], 256, 256, 16
    $region37: #{tpu_custom_call.1} parent=1 // pred_fallthru
      _
    // Predicated region
    $region38: #{tpu_custom_call.1} parent=1 // pred_check
      _
    $region39: #{tpu_custom_call.1} parent=1 // pred_check_branch
      %127 = sbr.rel (0) target = $region41
    $region40: #{tpu_custom_call.1} parent=1 // pred_region
      %s129 = ssub.s32 8192, 8192
      %130 = vsyncadd [#allocation17], %s129
      %s131 = sshll.u32 [#allocation18], 4
      %s132 = int_to_ptr.vmem [resolvable:$true] %s131
      %137 = dma.hbm_to_vmem [thread:$0]  %s9, 8192, %s132, [#allocation17], 256, 256, 16
    $region41: #{tpu_custom_call.1} parent=1 // pred_fallthru
      _
    // Predicated region
    $region42: #{tpu_custom_call.1} parent=1 // pred_check
      _
    $region43: #{tpu_custom_call.1} parent=1 // pred_check_branch
      %139 = sbr.rel (0) target = $region45
    $region44: #{tpu_custom_call.1} parent=1 // pred_region
      %s141 = ssub.s32 8192, 8192
      %142 = vsyncadd [#allocation20], %s141
      %s143 = sshll.u32 [#allocation19], 4
      %s144 = int_to_ptr.vmem [resolvable:$true] %s143
      %149 = dma.hbm_to_vmem [thread:$0]  %s10, 8192, %s144, [#allocation20], 256, 256, 16
    $region45: #{tpu_custom_call.1} parent=1 // pred_fallthru
      _
    // Predicated region
    $region46: #{tpu_custom_call.1} parent=1 // pred_check
      _
    $region47: #{tpu_custom_call.1} parent=1 // pred_check_branch
      %151 = sbr.rel (0) target = $region49
    $region48: #{tpu_custom_call.1} parent=1 // pred_region
      %s153 = ssub.s32 8192, 8192
      %154 = vsyncadd [#allocation20], %s153
      %s155 = sshll.u32 [#allocation21], 4
      %s156 = int_to_ptr.vmem [resolvable:$true] %s155
      %161 = dma.hbm_to_vmem [thread:$0]  %s11, 8192, %s156, [#allocation20], 256, 256, 16
    $region49: #{tpu_custom_call.1} parent=1 // pred_fallthru
      _
    // Predicated region
    $region50: #{tpu_custom_call.1} parent=1 // pred_check
      _
    $region51: #{tpu_custom_call.1} parent=1 // pred_check_branch
      %163 = sbr.rel (0) target = $region53
    $region52: #{tpu_custom_call.1} parent=1 // pred_region
      %164 = dma.done [#allocation5], 16
    $region53: #{tpu_custom_call.1} parent=1 // pred_fallthru
      _
    // Predicated region
    $region54: #{tpu_custom_call.1} parent=1 // pred_check
      _
    $region55: #{tpu_custom_call.1} parent=1 // pred_check_branch
      %166 = sbr.rel (0) target = $region57
    $region56: #{tpu_custom_call.1} parent=1 // pred_region
      %167 = dma.done [#allocation3], 256
    $region57: #{tpu_custom_call.1} parent=1 // pred_fallthru
      _
    // Predicated region
    $region58: #{tpu_custom_call.1} parent=1 // pred_check
      _
    $region59: #{tpu_custom_call.1} parent=1 // pred_check_branch
      %169 = sbr.rel (0) target = $region61
    $region60: #{tpu_custom_call.1} parent=1 // pred_region
      %170 = dma.done [#allocation8], 256
    $region61: #{tpu_custom_call.1} parent=1 // pred_fallthru
      _
    // Predicated region
    $region62: #{tpu_custom_call.1} parent=1 // pred_check
      _
    $region63: #{tpu_custom_call.1} parent=1 // pred_check_branch
      %172 = sbr.rel (0) target = $region65
    $region64: #{tpu_custom_call.1} parent=1 // pred_region
      %173 = dma.done [#allocation8], 256
    $region65: #{tpu_custom_call.1} parent=1 // pred_fallthru
      _
    // Predicated region
    $region66: #{tpu_custom_call.1} parent=1 // pred_check
      _
    $region67: #{tpu_custom_call.1} parent=1 // pred_check_branch
      %175 = sbr.rel (0) target = $region69
    $region68: #{tpu_custom_call.1} parent=1 // pred_region
      %176 = dma.done [#allocation11], 1024
    $region69: #{tpu_custom_call.1} parent=1 // pred_fallthru
      _
    // Predicated region
    $region70: #{tpu_custom_call.1} parent=1 // pred_check
      _
    $region71: #{tpu_custom_call.1} parent=1 // pred_check_branch
      %178 = sbr.rel (0) target = $region73
    $region72: #{tpu_custom_call.1} parent=1 // pred_region
      %179 = dma.done [#allocation11], 1024
    $region73: #{tpu_custom_call.1} parent=1 // pred_fallthru
      _
    // Predicated region
    $region74: #{tpu_custom_call.1} parent=1 // pred_check
      _
    $region75: #{tpu_custom_call.1} parent=1 // pred_check_branch
      %181 = sbr.rel (0) target = $region77
    $region76: #{tpu_custom_call.1} parent=1 // pred_region
      %182 = dma.done [#allocation14], 1024
    $region77: #{tpu_custom_call.1} parent=1 // pred_fallthru
      _
    // Predicated region
    $region78: #{tpu_custom_call.1} parent=1 // pred_check
      _
    $region79: #{tpu_custom_call.1} parent=1 // pred_check_branch
      %184 = sbr.rel (0) target = $region81
    $region80: #{tpu_custom_call.1} parent=1 // pred_region
      %185 = dma.done [#allocation14], 1024
    $region81: #{tpu_custom_call.1} parent=1 // pred_fallthru
      _
    // Predicated region
    $region82: #{tpu_custom_call.1} parent=1 // pred_check
      _
    $region83: #{tpu_custom_call.1} parent=1 // pred_check_branch
      %187 = sbr.rel (0) target = $region85
    $region84: #{tpu_custom_call.1} parent=1 // pred_region
      %188 = dma.done [#allocation17], 8192
    $region85: #{tpu_custom_call.1} parent=1 // pred_fallthru
      _
    // Predicated region
    $region86: #{tpu_custom_call.1} parent=1 // pred_check
      _
    $region87: #{tpu_custom_call.1} parent=1 // pred_check_branch
      %190 = sbr.rel (0) target = $region89
    $region88: #{tpu_custom_call.1} parent=1 // pred_region
      %191 = dma.done [#allocation17], 8192
    $region89: #{tpu_custom_call.1} parent=1 // pred_fallthru
      _
    // Predicated region
    $region90: #{tpu_custom_call.1} parent=1 // pred_check
      _
    $region91: #{tpu_custom_call.1} parent=1 // pred_check_branch
      %193 = sbr.rel (0) target = $region93
    $region92: #{tpu_custom_call.1} parent=1 // pred_region
      %194 = dma.done [#allocation20], 8192
    $region93: #{tpu_custom_call.1} parent=1 // pred_fallthru
      _
    // Predicated region
    $region94: #{tpu_custom_call.1} parent=1 // pred_check
      _
    $region95: #{tpu_custom_call.1} parent=1 // pred_check_branch
      %196 = sbr.rel (0) target = $region97
    $region96: #{tpu_custom_call.1} parent=1 // pred_region
      %197 = dma.done [#allocation20], 8192
    $region97: #{tpu_custom_call.1} parent=1 // pred_fallthru
      _
    %198 = sfence
    %s199 = sld [smem:[#allocation2]]
    %s200 = sld [smem:[#allocation2 + $0x1]]
    %s201 = sld [smem:[#allocation2 + $0x2]]
    %s202 = sld [smem:[#allocation2 + $0x3]]
    %s203 = sld [smem:[#allocation2 + $0x4]]
    %s204 = sld [smem:[#allocation2 + $0x5]]
    %s205 = sld [smem:[#allocation2 + $0x6]]
    %s206 = sld [smem:[#allocation2 + $0x7]]
    %v207 = vld [vmem:[#allocation6] sm:$0xff]
    %v208 = vld [vmem:[#allocation6 + $0x8] sm:$0xff]
    %v209 = vld [vmem:[#allocation7] sm:$0xff]
    %v210 = vld [vmem:[#allocation7 + $0x8] sm:$0xff]
    %v211 = vld [vmem:[#allocation9] sm:$0xff]
    %v212 = vld [vmem:[#allocation9 + $0x8] sm:$0xff]
    %v213 = vstv %s201
    %v214 = vmul.f32 %v213, %v207
    %v215 = vmul.f32 %v213, %v208
    %v216 = vstv %s202
    %v217 = vmul.f32 %v216, %v209
    %v218 = vmul.f32 %v216, %v210
    %v219 = vadd.f32 %v214, %v217
    %v220 = vadd.f32 %v215, %v218
    %v221 = vstv %s205
    %v222 = vadd.f32 %v219, %v221
    %v223 = vadd.f32 %v220, %v221
    %v224 = vstv %s203
    %v225 = vmul.f32 %v224, %v207
    %v226 = vmul.f32 %v224, %v208
    %v227 = vstv %s204
    %v228 = vmul.f32 %v227, %v209
    %v229 = vmul.f32 %v227, %v210
    %v230 = vadd.f32 %v225, %v228
    %v231 = vadd.f32 %v226, %v229
    %v232 = vstv %s206
    %v233 = vadd.f32 %v230, %v232
    %v234 = vadd.f32 %v231, %v232
    %v235 = vld [vmem:[#allocation10] sm:$0xff]
    %v236 = vld [vmem:[#allocation10 + $0x8] sm:$0xff]
    %v237 = vld [vmem:[#allocation10 + $0x10] sm:$0xff]
    %v238 = vld [vmem:[#allocation10 + $0x18] sm:$0xff]
    %v239 = vld [vmem:[#allocation10 + $0x20] sm:$0xff]
    %v240 = vld [vmem:[#allocation10 + $0x28] sm:$0xff]
    %v241 = vld [vmem:[#allocation10 + $0x30] sm:$0xff]
    %v242 = vld [vmem:[#allocation10 + $0x38] sm:$0xff]
    %v243 = vld [vmem:[#allocation12] sm:$0xff]
    %v244 = vld [vmem:[#allocation12 + $0x8] sm:$0xff]
    %v245 = vld [vmem:[#allocation12 + $0x10] sm:$0xff]
    %v246 = vld [vmem:[#allocation12 + $0x18] sm:$0xff]
    %v247 = vld [vmem:[#allocation12 + $0x20] sm:$0xff]
    %v248 = vld [vmem:[#allocation12 + $0x28] sm:$0xff]
    %v249 = vld [vmem:[#allocation12 + $0x30] sm:$0xff]
    %v250 = vld [vmem:[#allocation12 + $0x38] sm:$0xff]
    %v251 = vld [vmem:[#allocation13] sm:$0xff]
    %v252 = vld [vmem:[#allocation13 + $0x8] sm:$0xff]
    %v253 = vld [vmem:[#allocation13 + $0x10] sm:$0xff]
    %v254 = vld [vmem:[#allocation13 + $0x18] sm:$0xff]
    %v255 = vld [vmem:[#allocation13 + $0x20] sm:$0xff]
    %v256 = vld [vmem:[#allocation13 + $0x28] sm:$0xff]
    %v257 = vld [vmem:[#allocation13 + $0x30] sm:$0xff]
    %v258 = vld [vmem:[#allocation13 + $0x38] sm:$0xff]
    %v259 = vld [vmem:[#allocation15] sm:$0xff]
    %v260 = vld [vmem:[#allocation15 + $0x8] sm:$0xff]
    %v261 = vld [vmem:[#allocation15 + $0x10] sm:$0xff]
    %v262 = vld [vmem:[#allocation15 + $0x18] sm:$0xff]
    %v263 = vld [vmem:[#allocation15 + $0x20] sm:$0xff]
    %v264 = vld [vmem:[#allocation15 + $0x28] sm:$0xff]
    %v265 = vld [vmem:[#allocation15 + $0x30] sm:$0xff]
    %v266 = vld [vmem:[#allocation15 + $0x38] sm:$0xff]
    %v267 = vmul.f32 %v207, %v235
    %v268 = vmul.f32 %v208, %v236
    %v269 = vmul.f32 %v207, %v237
    %v270 = vmul.f32 %v208, %v238
    %v271 = vmul.f32 %v207, %v239
    %v272 = vmul.f32 %v208, %v240
    %v273 = vmul.f32 %v207, %v241
    %v274 = vmul.f32 %v208, %v242
    %v275 = vmul.f32 %v209, %v243
    %v276 = vmul.f32 %v210, %v244
    %v277 = vmul.f32 %v209, %v245
    %v278 = vmul.f32 %v210, %v246
    %v279 = vmul.f32 %v209, %v247
    %v280 = vmul.f32 %v210, %v248
    %v281 = vmul.f32 %v209, %v249
    %v282 = vmul.f32 %v210, %v250
    %v283 = vsub.f32 %v267, %v275
    %v284 = vsub.f32 %v268, %v276
    %v285 = vsub.f32 %v269, %v277
    %v286 = vsub.f32 %v270, %v278
    %v287 = vsub.f32 %v271, %v279
    %v288 = vsub.f32 %v272, %v280
    %v289 = vsub.f32 %v273, %v281
    %v290 = vsub.f32 %v274, %v282
    %v291 = vmul.f32 %v207, %v243
    %v292 = vmul.f32 %v208, %v244
    %v293 = vmul.f32 %v207, %v245
    %v294 = vmul.f32 %v208, %v246
    %v295 = vmul.f32 %v207, %v247
    %v296 = vmul.f32 %v208, %v248
    %v297 = vmul.f32 %v207, %v249
    %v298 = vmul.f32 %v208, %v250
    %v299 = vmul.f32 %v209, %v235
    %v300 = vmul.f32 %v210, %v236
    %v301 = vmul.f32 %v209, %v237
    %v302 = vmul.f32 %v210, %v238
    %v303 = vmul.f32 %v209, %v239
    %v304 = vmul.f32 %v210, %v240
    %v305 = vmul.f32 %v209, %v241
    %v306 = vmul.f32 %v210, %v242
    %v307 = vadd.f32 %v291, %v299
    %v308 = vadd.f32 %v292, %v300
    %v309 = vadd.f32 %v293, %v301
    %v310 = vadd.f32 %v294, %v302
    %v311 = vadd.f32 %v295, %v303
    %v312 = vadd.f32 %v296, %v304
    %v313 = vadd.f32 %v297, %v305
    %v314 = vadd.f32 %v298, %v306
    %v315 = vld [vmem:[#allocation16] sm:$0xff]
    %v316 = vld [vmem:[#allocation16 + $0x8] sm:$0xff]
    %v317 = vld [vmem:[#allocation16 + $0x10] sm:$0xff]
    %v318 = vld [vmem:[#allocation16 + $0x18] sm:$0xff]
    %v319 = vld [vmem:[#allocation16 + $0x20] sm:$0xff]
    %v320 = vld [vmem:[#allocation16 + $0x28] sm:$0xff]
    %v321 = vld [vmem:[#allocation16 + $0x30] sm:$0xff]
    %v322 = vld [vmem:[#allocation16 + $0x38] sm:$0xff]
    %v323 = vld [vmem:[#allocation16 + $0x40] sm:$0xff]
    %v324 = vld [vmem:[#allocation16 + $0x48] sm:$0xff]
    %v325 = vld [vmem:[#allocation16 + $0x50] sm:$0xff]
    %v326 = vld [vmem:[#allocation16 + $0x58] sm:$0xff]
    %v327 = vld [vmem:[#allocation16 + $0x60] sm:$0xff]
    %v328 = vld [vmem:[#allocation16 + $0x68] sm:$0xff]
    %v329 = vld [vmem:[#allocation16 + $0x70] sm:$0xff]
    %v330 = vld [vmem:[#allocation16 + $0x78] sm:$0xff]
    %v331 = vld [vmem:[#allocation16 + $0x80] sm:$0xff]
    %v332 = vld [vmem:[#allocation16 + $0x88] sm:$0xff]
    %v333 = vld [vmem:[#allocation16 + $0x90] sm:$0xff]
    %v334 = vld [vmem:[#allocation16 + $0x98] sm:$0xff]
    %v335 = vld [vmem:[#allocation16 + $0xa0] sm:$0xff]
    %v336 = vld [vmem:[#allocation16 + $0xa8] sm:$0xff]
    %v337 = vld [vmem:[#allocation16 + $0xb0] sm:$0xff]
    %v338 = vld [vmem:[#allocation16 + $0xb8] sm:$0xff]
    %v339 = vld [vmem:[#allocation16 + $0xc0] sm:$0xff]
    %v340 = vld [vmem:[#allocation16 + $0xc8] sm:$0xff]
    %v341 = vld [vmem:[#allocation16 + $0xd0] sm:$0xff]
    %v342 = vld [vmem:[#allocation16 + $0xd8] sm:$0xff]
    %v343 = vld [vmem:[#allocation16 + $0xe0] sm:$0xff]
    %v344 = vld [vmem:[#allocation16 + $0xe8] sm:$0xff]
    %v345 = vld [vmem:[#allocation16 + $0xf0] sm:$0xff]
    %v346 = vld [vmem:[#allocation16 + $0xf8] sm:$0xff]
    %v347 = vld [vmem:[#allocation16 + $0x100] sm:$0xff]
    %v348 = vld [vmem:[#allocation16 + $0x108] sm:$0xff]
    %v349 = vld [vmem:[#allocation16 + $0x110] sm:$0xff]
    %v350 = vld [vmem:[#allocation16 + $0x118] sm:$0xff]
    %v351 = vld [vmem:[#allocation16 + $0x120] sm:$0xff]
    %v352 = vld [vmem:[#allocation16 + $0x128] sm:$0xff]
    %v353 = vld [vmem:[#allocation16 + $0x130] sm:$0xff]
    %v354 = vld [vmem:[#allocation16 + $0x138] sm:$0xff]
    %v355 = vld [vmem:[#allocation16 + $0x140] sm:$0xff]
    %v356 = vld [vmem:[#allocation16 + $0x148] sm:$0xff]
    %v357 = vld [vmem:[#allocation16 + $0x150] sm:$0xff]
    %v358 = vld [vmem:[#allocation16 + $0x158] sm:$0xff]
    %v359 = vld [vmem:[#allocation16 + $0x160] sm:$0xff]
    %v360 = vld [vmem:[#allocation16 + $0x168] sm:$0xff]
    %v361 = vld [vmem:[#allocation16 + $0x170] sm:$0xff]
    %v362 = vld [vmem:[#allocation16 + $0x178] sm:$0xff]
    %v363 = vld [vmem:[#allocation16 + $0x180] sm:$0xff]
    %v364 = vld [vmem:[#allocation16 + $0x188] sm:$0xff]
    %v365 = vld [vmem:[#allocation16 + $0x190] sm:$0xff]
    %v366 = vld [vmem:[#allocation16 + $0x198] sm:$0xff]
    %v367 = vld [vmem:[#allocation16 + $0x1a0] sm:$0xff]
    %v368 = vld [vmem:[#allocation16 + $0x1a8] sm:$0xff]
    %v369 = vld [vmem:[#allocation16 + $0x1b0] sm:$0xff]
    %v370 = vld [vmem:[#allocation16 + $0x1b8] sm:$0xff]
    %v371 = vld [vmem:[#allocation16 + $0x1c0] sm:$0xff]
    %v372 = vld [vmem:[#allocation16 + $0x1c8] sm:$0xff]
    %v373 = vld [vmem:[#allocation16 + $0x1d0] sm:$0xff]
    %v374 = vld [vmem:[#allocation16 + $0x1d8] sm:$0xff]
    %v375 = vld [vmem:[#allocation16 + $0x1e0] sm:$0xff]
    %v376 = vld [vmem:[#allocation16 + $0x1e8] sm:$0xff]
    %v377 = vld [vmem:[#allocation16 + $0x1f0] sm:$0xff]
    %v378 = vld [vmem:[#allocation16 + $0x1f8] sm:$0xff]
    %v379 = vld [vmem:[#allocation18] sm:$0xff]
    %v380 = vld [vmem:[#allocation18 + $0x8] sm:$0xff]
    %v381 = vld [vmem:[#allocation18 + $0x10] sm:$0xff]
    %v382 = vld [vmem:[#allocation18 + $0x18] sm:$0xff]
    %v383 = vld [vmem:[#allocation18 + $0x20] sm:$0xff]
    %v384 = vld [vmem:[#allocation18 + $0x28] sm:$0xff]
    %v385 = vld [vmem:[#allocation18 + $0x30] sm:$0xff]
    %v386 = vld [vmem:[#allocation18 + $0x38] sm:$0xff]
    %v387 = vld [vmem:[#allocation18 + $0x40] sm:$0xff]
    %v388 = vld [vmem:[#allocation18 + $0x48] sm:$0xff]
    %v389 = vld [vmem:[#allocation18 + $0x50] sm:$0xff]
    %v390 = vld [vmem:[#allocation18 + $0x58] sm:$0xff]
    %v391 = vld [vmem:[#allocation18 + $0x60] sm:$0xff]
    %v392 = vld [vmem:[#allocation18 + $0x68] sm:$0xff]
    %v393 = vld [vmem:[#allocation18 + $0x70] sm:$0xff]
    %v394 = vld [vmem:[#allocation18 + $0x78] sm:$0xff]
    %v395 = vld [vmem:[#allocation18 + $0x80] sm:$0xff]
    %v396 = vld [vmem:[#allocation18 + $0x88] sm:$0xff]
    %v397 = vld [vmem:[#allocation18 + $0x90] sm:$0xff]
    %v398 = vld [vmem:[#allocation18 + $0x98] sm:$0xff]
    %v399 = vld [vmem:[#allocation18 + $0xa0] sm:$0xff]
    %v400 = vld [vmem:[#allocation18 + $0xa8] sm:$0xff]
    %v401 = vld [vmem:[#allocation18 + $0xb0] sm:$0xff]
    %v402 = vld [vmem:[#allocation18 + $0xb8] sm:$0xff]
    %v403 = vld [vmem:[#allocation18 + $0xc0] sm:$0xff]
    %v404 = vld [vmem:[#allocation18 + $0xc8] sm:$0xff]
    %v405 = vld [vmem:[#allocation18 + $0xd0] sm:$0xff]
    %v406 = vld [vmem:[#allocation18 + $0xd8] sm:$0xff]
    %v407 = vld [vmem:[#allocation18 + $0xe0] sm:$0xff]
    %v408 = vld [vmem:[#allocation18 + $0xe8] sm:$0xff]
    %v409 = vld [vmem:[#allocation18 + $0xf0] sm:$0xff]
    %v410 = vld [vmem:[#allocation18 + $0xf8] sm:$0xff]
    %v411 = vld [vmem:[#allocation18 + $0x100] sm:$0xff]
    %v412 = vld [vmem:[#allocation18 + $0x108] sm:$0xff]
    %v413 = vld [vmem:[#allocation18 + $0x110] sm:$0xff]
    %v414 = vld [vmem:[#allocation18 + $0x118] sm:$0xff]
    %v415 = vld [vmem:[#allocation18 + $0x120] sm:$0xff]
    %v416 = vld [vmem:[#allocation18 + $0x128] sm:$0xff]
    %v417 = vld [vmem:[#allocation18 + $0x130] sm:$0xff]
    %v418 = vld [vmem:[#allocation18 + $0x138] sm:$0xff]
    %v419 = vld [vmem:[#allocation18 + $0x140] sm:$0xff]
    %v420 = vld [vmem:[#allocation18 + $0x148] sm:$0xff]
    %v421 = vld [vmem:[#allocation18 + $0x150] sm:$0xff]
    %v422 = vld [vmem:[#allocation18 + $0x158] sm:$0xff]
    %v423 = vld [vmem:[#allocation18 + $0x160] sm:$0xff]
    %v424 = vld [vmem:[#allocation18 + $0x168] sm:$0xff]
    %v425 = vld [vmem:[#allocation18 + $0x170] sm:$0xff]
    %v426 = vld [vmem:[#allocation18 + $0x178] sm:$0xff]
    %v427 = vld [vmem:[#allocation18 + $0x180] sm:$0xff]
    %v428 = vld [vmem:[#allocation18 + $0x188] sm:$0xff]
    %v429 = vld [vmem:[#allocation18 + $0x190] sm:$0xff]
    %v430 = vld [vmem:[#allocation18 + $0x198] sm:$0xff]
    %v431 = vld [vmem:[#allocation18 + $0x1a0] sm:$0xff]
    %v432 = vld [vmem:[#allocation18 + $0x1a8] sm:$0xff]
    %v433 = vld [vmem:[#allocation18 + $0x1b0] sm:$0xff]
    %v434 = vld [vmem:[#allocation18 + $0x1b8] sm:$0xff]
    %v435 = vld [vmem:[#allocation18 + $0x1c0] sm:$0xff]
    %v436 = vld [vmem:[#allocation18 + $0x1c8] sm:$0xff]
    %v437 = vld [vmem:[#allocation18 + $0x1d0] sm:$0xff]
    %v438 = vld [vmem:[#allocation18 + $0x1d8] sm:$0xff]
    %v439 = vld [vmem:[#allocation18 + $0x1e0] sm:$0xff]
    %v440 = vld [vmem:[#allocation18 + $0x1e8] sm:$0xff]
    %v441 = vld [vmem:[#allocation18 + $0x1f0] sm:$0xff]
    %v442 = vld [vmem:[#allocation18 + $0x1f8] sm:$0xff]
    %443 = vmatprep.subr.mxu0 %v316
    %444 = vmatpush1.msra.mxu0 %v315
    %445 = vmatprep.subr.mxu0 %v318
    %446 = vmatpush1.msra.mxu0 %v317
    %447 = vmatprep.subr.mxu0 %v320
    %448 = vmatpush1.msra.mxu0 %v319
    %449 = vmatprep.subr.mxu0 %v322
    %450 = vmatpush1.msra.mxu0 %v321
    %451 = vmatprep.subr.mxu0 %v324
    %452 = vmatpush1.msra.mxu0 %v323
    %453 = vmatprep.subr.mxu0 %v326
    %454 = vmatpush1.msra.mxu0 %v325
    %455 = vmatprep.subr.mxu0 %v328
    %456 = vmatpush1.msra.mxu0 %v327
    %457 = vmatprep.subr.mxu0 %v330
    %458 = vmatpush1.msra.mxu0 %v329
    %459 = vmatprep.subr.mxu0 %v332
    %460 = vmatpush1.msra.mxu0 %v331
    %461 = vmatprep.subr.mxu0 %v334
    %462 = vmatpush1.msra.mxu0 %v333
    %463 = vmatprep.subr.mxu0 %v336
    %464 = vmatpush1.msra.mxu0 %v335
    %465 = vmatprep.subr.mxu0 %v338
    %466 = vmatpush1.msra.mxu0 %v337
    %467 = vmatprep.subr.mxu0 %v340
    %468 = vmatpush1.msra.mxu0 %v339
    %469 = vmatprep.subr.mxu0 %v342
    %470 = vmatpush1.msra.mxu0 %v341
    %471 = vmatprep.subr.mxu0 %v344
    %472 = vmatpush1.msra.mxu0 %v343
    %473 = vmatprep.subr.mxu0 %v346
    %474 = vmatpush1.msra.mxu0 %v345
    %475 = vmatprep.subr.mxu0 %v348
    %476 = vmatpush1.msra.mxu0 %v347
    %477 = vmatprep.subr.mxu0 %v350
    %478 = vmatpush1.msra.mxu0 %v349
    %479 = vmatprep.subr.mxu0 %v352
    %480 = vmatpush1.msra.mxu0 %v351
    %481 = vmatprep.subr.mxu0 %v354
    %482 = vmatpush1.msra.mxu0 %v353
    %483 = vmatprep.subr.mxu0 %v356
    %484 = vmatpush1.msra.mxu0 %v355
    %485 = vmatprep.subr.mxu0 %v358
    %486 = vmatpush1.msra.mxu0 %v357
    %487 = vmatprep.subr.mxu0 %v360
    %488 = vmatpush1.msra.mxu0 %v359
    %489 = vmatprep.subr.mxu0 %v362
    %490 = vmatpush1.msra.mxu0 %v361
    %491 = vmatprep.subr.mxu0 %v364
    %492 = vmatpush1.msra.mxu0 %v363
    %493 = vmatprep.subr.mxu0 %v366
    %494 = vmatpush1.msra.mxu0 %v365
    %495 = vmatprep.subr.mxu0 %v368
    %496 = vmatpush1.msra.mxu0 %v367
    %497 = vmatprep.subr.mxu0 %v370
    %498 = vmatpush1.msra.mxu0 %v369
    %499 = vmatprep.subr.mxu0 %v372
    %500 = vmatpush1.msra.mxu0 %v371
    %501 = vmatprep.subr.mxu0 %v374
    %502 = vmatpush1.msra.mxu0 %v373
    %503 = vmatprep.subr.mxu0 %v376
    %504 = vmatpush1.msra.mxu0 %v375
    %505 = vmatprep.subr.mxu0 %v378
    %506 = vmatpush1.msra.mxu0 %v377
    %507 = vmatprep.mubr.f32.mxu0 %v284
    %508 = vmatmul.mubr.f32.gmra.mrb[0].mxu0 %v283
    %v509 = vpop.f32.mrb[0].mxu0
    %v510 = vadd.f32 0.0, %v509
    %v511 = vpop.f32.mrb[0].mxu0
    %v512 = vadd.f32 0.0, %v511
    %513 = vmatprep.mubr.f32.mxu0 %v286
    %514 = vmatmul.mubr.f32.gmra.mrb[0].mxu0 %v285
    %v515 = vpop.f32.mrb[0].mxu0
    %v516 = vadd.f32 0.0, %v515
    %v517 = vpop.f32.mrb[0].mxu0
    %v518 = vadd.f32 0.0, %v517
    %519 = vmatprep.mubr.f32.mxu0 %v288
    %520 = vmatmul.mubr.f32.gmra.mrb[0].mxu0 %v287
    %v521 = vpop.f32.mrb[0].mxu0
    %v522 = vadd.f32 0.0, %v521
    %v523 = vpop.f32.mrb[0].mxu0
    %v524 = vadd.f32 0.0, %v523
    %525 = vmatprep.mubr.f32.mxu0 %v290
    %526 = vmatmul.mubr.f32.gmra.mrb[0].mxu0 %v289
    %v527 = vpop.f32.mrb[0].mxu0
    %v528 = vadd.f32 0.0, %v527
    %v529 = vpop.f32.mrb[0].mxu0
    %v530 = vadd.f32 0.0, %v529
    %531 = vdwg.mxu0
    %532 = vmatprep.subr.mxu0 %v380
    %533 = vmatpush1.msra.mxu0 %v379
    %534 = vmatprep.subr.mxu0 %v382
    %535 = vmatpush1.msra.mxu0 %v381
    %536 = vmatprep.subr.mxu0 %v384
    %537 = vmatpush1.msra.mxu0 %v383
    %538 = vmatprep.subr.mxu0 %v386
    %539 = vmatpush1.msra.mxu0 %v385
    %540 = vmatprep.subr.mxu0 %v388
    %541 = vmatpush1.msra.mxu0 %v387
    %542 = vmatprep.subr.mxu0 %v390
    %543 = vmatpush1.msra.mxu0 %v389
    %544 = vmatprep.subr.mxu0 %v392
    %545 = vmatpush1.msra.mxu0 %v391
    %546 = vmatprep.subr.mxu0 %v394
    %547 = vmatpush1.msra.mxu0 %v393
    %548 = vmatprep.subr.mxu0 %v396
    %549 = vmatpush1.msra.mxu0 %v395
    %550 = vmatprep.subr.mxu0 %v398
    %551 = vmatpush1.msra.mxu0 %v397
    %552 = vmatprep.subr.mxu0 %v400
    %553 = vmatpush1.msra.mxu0 %v399
    %554 = vmatprep.subr.mxu0 %v402
    %555 = vmatpush1.msra.mxu0 %v401
    %556 = vmatprep.subr.mxu0 %v404
    %557 = vmatpush1.msra.mxu0 %v403
    %558 = vmatprep.subr.mxu0 %v406
    %559 = vmatpush1.msra.mxu0 %v405
    %560 = vmatprep.subr.mxu0 %v408
    %561 = vmatpush1.msra.mxu0 %v407
    %562 = vmatprep.subr.mxu0 %v410
    %563 = vmatpush1.msra.mxu0 %v409
    %564 = vmatprep.subr.mxu0 %v412
    %565 = vmatpush1.msra.mxu0 %v411
    %566 = vmatprep.subr.mxu0 %v414
    %567 = vmatpush1.msra.mxu0 %v413
    %568 = vmatprep.subr.mxu0 %v416
    %569 = vmatpush1.msra.mxu0 %v415
    %570 = vmatprep.subr.mxu0 %v418
    %571 = vmatpush1.msra.mxu0 %v417
    %572 = vmatprep.subr.mxu0 %v420
    %573 = vmatpush1.msra.mxu0 %v419
    %574 = vmatprep.subr.mxu0 %v422
    %575 = vmatpush1.msra.mxu0 %v421
    %576 = vmatprep.subr.mxu0 %v424
    %577 = vmatpush1.msra.mxu0 %v423
    %578 = vmatprep.subr.mxu0 %v426
    %579 = vmatpush1.msra.mxu0 %v425
    %580 = vmatprep.subr.mxu0 %v428
    %581 = vmatpush1.msra.mxu0 %v427
    %582 = vmatprep.subr.mxu0 %v430
    %583 = vmatpush1.msra.mxu0 %v429
    %584 = vmatprep.subr.mxu0 %v432
    %585 = vmatpush1.msra.mxu0 %v431
    %586 = vmatprep.subr.mxu0 %v434
    %587 = vmatpush1.msra.mxu0 %v433
    %588 = vmatprep.subr.mxu0 %v436
    %589 = vmatpush1.msra.mxu0 %v435
    %590 = vmatprep.subr.mxu0 %v438
    %591 = vmatpush1.msra.mxu0 %v437
    %592 = vmatprep.subr.mxu0 %v440
    %593 = vmatpush1.msra.mxu0 %v439
    %594 = vmatprep.subr.mxu0 %v442
    %595 = vmatpush1.msra.mxu0 %v441
    %596 = vmatprep.mubr.f32.mxu0 %v308
    %597 = vmatmul.mubr.f32.gmra.mrb[0].mxu0 %v307
    %v598 = vpop.f32.mrb[0].mxu0
    %v599 = vadd.f32 0.0, %v598
    %v600 = vpop.f32.mrb[0].mxu0
    %v601 = vadd.f32 0.0, %v600
    %602 = vmatprep.mubr.f32.mxu0 %v310
    %603 = vmatmul.mubr.f32.gmra.mrb[0].mxu0 %v309
    %v604 = vpop.f32.mrb[0].mxu0
    %v605 = vadd.f32 0.0, %v604
    %v606 = vpop.f32.mrb[0].mxu0
    %v607 = vadd.f32 0.0, %v606
    %608 = vmatprep.mubr.f32.mxu0 %v312
    %609 = vmatmul.mubr.f32.gmra.mrb[0].mxu0 %v311
    %v610 = vpop.f32.mrb[0].mxu0
    %v611 = vadd.f32 0.0, %v610
    %v612 = vpop.f32.mrb[0].mxu0
    %v613 = vadd.f32 0.0, %v612
    %614 = vmatprep.mubr.f32.mxu0 %v314
    %615 = vmatmul.mubr.f32.gmra.mrb[0].mxu0 %v313
    %v616 = vpop.f32.mrb[0].mxu0
    %v617 = vadd.f32 0.0, %v616
    %v618 = vpop.f32.mrb[0].mxu0
    %v619 = vadd.f32 0.0, %v618
    %620 = vdwg.mxu0
    %v621 = vsub.f32 %v510, %v599
    %v622 = vsub.f32 %v512, %v601
    %v623 = vsub.f32 %v516, %v605
    %v624 = vsub.f32 %v518, %v607
    %v625 = vsub.f32 %v522, %v611
    %v626 = vsub.f32 %v524, %v613
    %v627 = vsub.f32 %v528, %v617
    %v628 = vsub.f32 %v530, %v619
    %629 = vmatprep.subr.mxu0 %v316
    %630 = vmatpush1.msra.mxu0 %v315
    %631 = vmatprep.subr.mxu0 %v318
    %632 = vmatpush1.msra.mxu0 %v317
    %633 = vmatprep.subr.mxu0 %v320
    %634 = vmatpush1.msra.mxu0 %v319
    %635 = vmatprep.subr.mxu0 %v322
    %636 = vmatpush1.msra.mxu0 %v321
    %637 = vmatprep.subr.mxu0 %v324
    %638 = vmatpush1.msra.mxu0 %v323
    %639 = vmatprep.subr.mxu0 %v326
    %640 = vmatpush1.msra.mxu0 %v325
    %641 = vmatprep.subr.mxu0 %v328
    %642 = vmatpush1.msra.mxu0 %v327
    %643 = vmatprep.subr.mxu0 %v330
    %644 = vmatpush1.msra.mxu0 %v329
    %645 = vmatprep.subr.mxu0 %v332
    %646 = vmatpush1.msra.mxu0 %v331
    %647 = vmatprep.subr.mxu0 %v334
    %648 = vmatpush1.msra.mxu0 %v333
    %649 = vmatprep.subr.mxu0 %v336
    %650 = vmatpush1.msra.mxu0 %v335
    %651 = vmatprep.subr.mxu0 %v338
    %652 = vmatpush1.msra.mxu0 %v337
    %653 = vmatprep.subr.mxu0 %v340
    %654 = vmatpush1.msra.mxu0 %v339
    %655 = vmatprep.subr.mxu0 %v342
    %656 = vmatpush1.msra.mxu0 %v341
    %657 = vmatprep.subr.mxu0 %v344
    %658 = vmatpush1.msra.mxu0 %v343
    %659 = vmatprep.subr.mxu0 %v346
    %660 = vmatpush1.msra.mxu0 %v345
    %661 = vmatprep.subr.mxu0 %v348
    %662 = vmatpush1.msra.mxu0 %v347
    %663 = vmatprep.subr.mxu0 %v350
    %664 = vmatpush1.msra.mxu0 %v349
    %665 = vmatprep.subr.mxu0 %v352
    %666 = vmatpush1.msra.mxu0 %v351
    %667 = vmatprep.subr.mxu0 %v354
    %668 = vmatpush1.msra.mxu0 %v353
    %669 = vmatprep.subr.mxu0 %v356
    %670 = vmatpush1.msra.mxu0 %v355
    %671 = vmatprep.subr.mxu0 %v358
    %672 = vmatpush1.msra.mxu0 %v357
    %673 = vmatprep.subr.mxu0 %v360
    %674 = vmatpush1.msra.mxu0 %v359
    %675 = vmatprep.subr.mxu0 %v362
    %676 = vmatpush1.msra.mxu0 %v361
    %677 = vmatprep.subr.mxu0 %v364
    %678 = vmatpush1.msra.mxu0 %v363
    %679 = vmatprep.subr.mxu0 %v366
    %680 = vmatpush1.msra.mxu0 %v365
    %681 = vmatprep.subr.mxu0 %v368
    %682 = vmatpush1.msra.mxu0 %v367
    %683 = vmatprep.subr.mxu0 %v370
    %684 = vmatpush1.msra.mxu0 %v369
    %685 = vmatprep.subr.mxu0 %v372
    %686 = vmatpush1.msra.mxu0 %v371
    %687 = vmatprep.subr.mxu0 %v374
    %688 = vmatpush1.msra.mxu0 %v373
    %689 = vmatprep.subr.mxu0 %v376
    %690 = vmatpush1.msra.mxu0 %v375
    %691 = vmatprep.subr.mxu0 %v378
    %692 = vmatpush1.msra.mxu0 %v377
    %693 = vmatprep.mubr.f32.mxu0 %v308
    %694 = vmatmul.mubr.f32.gmra.mrb[0].mxu0 %v307
    %v695 = vpop.f32.mrb[0].mxu0
    %v696 = vadd.f32 0.0, %v695
    %v697 = vpop.f32.mrb[0].mxu0
    %v698 = vadd.f32 0.0, %v697
    %699 = vmatprep.mubr.f32.mxu0 %v310
    %700 = vmatmul.mubr.f32.gmra.mrb[0].mxu0 %v309
    %v701 = vpop.f32.mrb[0].mxu0
    %v702 = vadd.f32 0.0, %v701
    %v703 = vpop.f32.mrb[0].mxu0
    %v704 = vadd.f32 0.0, %v703
    %705 = vmatprep.mubr.f32.mxu0 %v312
    %706 = vmatmul.mubr.f32.gmra.mrb[0].mxu0 %v311
    %v707 = vpop.f32.mrb[0].mxu0
    %v708 = vadd.f32 0.0, %v707
    %v709 = vpop.f32.mrb[0].mxu0
    %v710 = vadd.f32 0.0, %v709
    %711 = vmatprep.mubr.f32.mxu0 %v314
    %712 = vmatmul.mubr.f32.gmra.mrb[0].mxu0 %v313
    %v713 = vpop.f32.mrb[0].mxu0
    %v714 = vadd.f32 0.0, %v713
    %v715 = vpop.f32.mrb[0].mxu0
    %v716 = vadd.f32 0.0, %v715
    %717 = vdwg.mxu0
    %718 = vmatprep.subr.mxu0 %v380
    %719 = vmatpush1.msra.mxu0 %v379
    %720 = vmatprep.subr.mxu0 %v382
    %721 = vmatpush1.msra.mxu0 %v381
    %722 = vmatprep.subr.mxu0 %v384
    %723 = vmatpush1.msra.mxu0 %v383
    %724 = vmatprep.subr.mxu0 %v386
    %725 = vmatpush1.msra.mxu0 %v385
    %726 = vmatprep.subr.mxu0 %v388
    %727 = vmatpush1.msra.mxu0 %v387
    %728 = vmatprep.subr.mxu0 %v390
    %729 = vmatpush1.msra.mxu0 %v389
    %730 = vmatprep.subr.mxu0 %v392
    %731 = vmatpush1.msra.mxu0 %v391
    %732 = vmatprep.subr.mxu0 %v394
    %733 = vmatpush1.msra.mxu0 %v393
    %734 = vmatprep.subr.mxu0 %v396
    %735 = vmatpush1.msra.mxu0 %v395
    %736 = vmatprep.subr.mxu0 %v398
    %737 = vmatpush1.msra.mxu0 %v397
    %738 = vmatprep.subr.mxu0 %v400
    %739 = vmatpush1.msra.mxu0 %v399
    %740 = vmatprep.subr.mxu0 %v402
    %741 = vmatpush1.msra.mxu0 %v401
    %742 = vmatprep.subr.mxu0 %v404
    %743 = vmatpush1.msra.mxu0 %v403
    %744 = vmatprep.subr.mxu0 %v406
    %745 = vmatpush1.msra.mxu0 %v405
    %746 = vmatprep.subr.mxu0 %v408
    %747 = vmatpush1.msra.mxu0 %v407
    %748 = vmatprep.subr.mxu0 %v410
    %749 = vmatpush1.msra.mxu0 %v409
    %750 = vmatprep.subr.mxu0 %v412
    %751 = vmatpush1.msra.mxu0 %v411
    %752 = vmatprep.subr.mxu0 %v414
    %753 = vmatpush1.msra.mxu0 %v413
    %754 = vmatprep.subr.mxu0 %v416
    %755 = vmatpush1.msra.mxu0 %v415
    %756 = vmatprep.subr.mxu0 %v418
    %757 = vmatpush1.msra.mxu0 %v417
    %758 = vmatprep.subr.mxu0 %v420
    %759 = vmatpush1.msra.mxu0 %v419
    %760 = vmatprep.subr.mxu0 %v422
    %761 = vmatpush1.msra.mxu0 %v421
    %762 = vmatprep.subr.mxu0 %v424
    %763 = vmatpush1.msra.mxu0 %v423
    %764 = vmatprep.subr.mxu0 %v426
    %765 = vmatpush1.msra.mxu0 %v425
    %766 = vmatprep.subr.mxu0 %v428
    %767 = vmatpush1.msra.mxu0 %v427
    %768 = vmatprep.subr.mxu0 %v430
    %769 = vmatpush1.msra.mxu0 %v429
    %770 = vmatprep.subr.mxu0 %v432
    %771 = vmatpush1.msra.mxu0 %v431
    %772 = vmatprep.subr.mxu0 %v434
    %773 = vmatpush1.msra.mxu0 %v433
    %774 = vmatprep.subr.mxu0 %v436
    %775 = vmatpush1.msra.mxu0 %v435
    %776 = vmatprep.subr.mxu0 %v438
    %777 = vmatpush1.msra.mxu0 %v437
    %778 = vmatprep.subr.mxu0 %v440
    %779 = vmatpush1.msra.mxu0 %v439
    %780 = vmatprep.subr.mxu0 %v442
    %781 = vmatpush1.msra.mxu0 %v441
    %782 = vmatprep.mubr.f32.mxu0 %v284
    %783 = vmatmul.mubr.f32.gmra.mrb[0].mxu0 %v283
    %v784 = vpop.f32.mrb[0].mxu0
    %v785 = vadd.f32 %v696, %v784
    %v786 = vpop.f32.mrb[0].mxu0
    %v787 = vadd.f32 %v698, %v786
    %788 = vmatprep.mubr.f32.mxu0 %v286
    %789 = vmatmul.mubr.f32.gmra.mrb[0].mxu0 %v285
    %v790 = vpop.f32.mrb[0].mxu0
    %v791 = vadd.f32 %v702, %v790
    %v792 = vpop.f32.mrb[0].mxu0
    %v793 = vadd.f32 %v704, %v792
    %794 = vmatprep.mubr.f32.mxu0 %v288
    %795 = vmatmul.mubr.f32.gmra.mrb[0].mxu0 %v287
    %v796 = vpop.f32.mrb[0].mxu0
    %v797 = vadd.f32 %v708, %v796
    %v798 = vpop.f32.mrb[0].mxu0
    %v799 = vadd.f32 %v710, %v798
    %800 = vmatprep.mubr.f32.mxu0 %v290
    %801 = vmatmul.mubr.f32.gmra.mrb[0].mxu0 %v289
    %v802 = vpop.f32.mrb[0].mxu0
    %v803 = vadd.f32 %v714, %v802
    %v804 = vpop.f32.mrb[0].mxu0
    %v805 = vadd.f32 %v716, %v804
    %806 = vdwg.mxu0
    %v807 = vmul.f32 %v211, %v621
    %v808 = vmul.f32 %v212, %v622
    %v809 = vmul.f32 %v211, %v623
    %v810 = vmul.f32 %v212, %v624
    %v811 = vmul.f32 %v211, %v625
    %v812 = vmul.f32 %v212, %v626
    %v813 = vmul.f32 %v211, %v627
    %v814 = vmul.f32 %v212, %v628
    %v815 = vsub.f32 %v807, %v251
    %v816 = vsub.f32 %v808, %v252
    %v817 = vsub.f32 %v809, %v253
    %v818 = vsub.f32 %v810, %v254
    %v819 = vsub.f32 %v811, %v255
    %v820 = vsub.f32 %v812, %v256
    %v821 = vsub.f32 %v813, %v257
    %v822 = vsub.f32 %v814, %v258
    %v823 = vmul.f32 %v211, %v815
    %v824 = vmul.f32 %v212, %v816
    %v825 = vmul.f32 %v211, %v817
    %v826 = vmul.f32 %v212, %v818
    %v827 = vmul.f32 %v211, %v819
    %v828 = vmul.f32 %v212, %v820
    %v829 = vmul.f32 %v211, %v821
    %v830 = vmul.f32 %v212, %v822
    %v831 = vmul.f32 %v211, %v785
    %v832 = vmul.f32 %v212, %v787
    %v833 = vmul.f32 %v211, %v791
    %v834 = vmul.f32 %v212, %v793
    %v835 = vmul.f32 %v211, %v797
    %v836 = vmul.f32 %v212, %v799
    %v837 = vmul.f32 %v211, %v803
    %v838 = vmul.f32 %v212, %v805
    %v839 = vsub.f32 %v831, %v259
    %v840 = vsub.f32 %v832, %v260
    %v841 = vsub.f32 %v833, %v261
    %v842 = vsub.f32 %v834, %v262
    %v843 = vsub.f32 %v835, %v263
    %v844 = vsub.f32 %v836, %v264
    %v845 = vsub.f32 %v837, %v265
    %v846 = vsub.f32 %v838, %v266
    %v847 = vmul.f32 %v211, %v839
    %v848 = vmul.f32 %v212, %v840
    %v849 = vmul.f32 %v211, %v841
    %v850 = vmul.f32 %v212, %v842
    %v851 = vmul.f32 %v211, %v843
    %v852 = vmul.f32 %v212, %v844
    %v853 = vmul.f32 %v211, %v845
    %v854 = vmul.f32 %v212, %v846
    %v855 = vld [vmem:[#allocation19] sm:$0xff]
    %v856 = vld [vmem:[#allocation19 + $0x8] sm:$0xff]
    %v857 = vld [vmem:[#allocation19 + $0x10] sm:$0xff]
    %v858 = vld [vmem:[#allocation19 + $0x18] sm:$0xff]
    %v859 = vld [vmem:[#allocation19 + $0x20] sm:$0xff]
    %v860 = vld [vmem:[#allocation19 + $0x28] sm:$0xff]
    %v861 = vld [vmem:[#allocation19 + $0x30] sm:$0xff]
    %v862 = vld [vmem:[#allocation19 + $0x38] sm:$0xff]
    %v863 = vld [vmem:[#allocation19 + $0x40] sm:$0xff]
    %v864 = vld [vmem:[#allocation19 + $0x48] sm:$0xff]
    %v865 = vld [vmem:[#allocation19 + $0x50] sm:$0xff]
    %v866 = vld [vmem:[#allocation19 + $0x58] sm:$0xff]
    %v867 = vld [vmem:[#allocation19 + $0x60] sm:$0xff]
    %v868 = vld [vmem:[#allocation19 + $0x68] sm:$0xff]
    %v869 = vld [vmem:[#allocation19 + $0x70] sm:$0xff]
    %v870 = vld [vmem:[#allocation19 + $0x78] sm:$0xff]
    %v871 = vld [vmem:[#allocation19 + $0x80] sm:$0xff]
    %v872 = vld [vmem:[#allocation19 + $0x88] sm:$0xff]
    %v873 = vld [vmem:[#allocation19 + $0x90] sm:$0xff]
    %v874 = vld [vmem:[#allocation19 + $0x98] sm:$0xff]
    %v875 = vld [vmem:[#allocation19 + $0xa0] sm:$0xff]
    %v876 = vld [vmem:[#allocation19 + $0xa8] sm:$0xff]
    %v877 = vld [vmem:[#allocation19 + $0xb0] sm:$0xff]
    %v878 = vld [vmem:[#allocation19 + $0xb8] sm:$0xff]
    %v879 = vld [vmem:[#allocation19 + $0xc0] sm:$0xff]
    %v880 = vld [vmem:[#allocation19 + $0xc8] sm:$0xff]
    %v881 = vld [vmem:[#allocation19 + $0xd0] sm:$0xff]
    %v882 = vld [vmem:[#allocation19 + $0xd8] sm:$0xff]
    %v883 = vld [vmem:[#allocation19 + $0xe0] sm:$0xff]
    %v884 = vld [vmem:[#allocation19 + $0xe8] sm:$0xff]
    %v885 = vld [vmem:[#allocation19 + $0xf0] sm:$0xff]
    %v886 = vld [vmem:[#allocation19 + $0xf8] sm:$0xff]
    %v887 = vld [vmem:[#allocation19 + $0x100] sm:$0xff]
    %v888 = vld [vmem:[#allocation19 + $0x108] sm:$0xff]
    %v889 = vld [vmem:[#allocation19 + $0x110] sm:$0xff]
    %v890 = vld [vmem:[#allocation19 + $0x118] sm:$0xff]
    %v891 = vld [vmem:[#allocation19 + $0x120] sm:$0xff]
    %v892 = vld [vmem:[#allocation19 + $0x128] sm:$0xff]
    %v893 = vld [vmem:[#allocation19 + $0x130] sm:$0xff]
    %v894 = vld [vmem:[#allocation19 + $0x138] sm:$0xff]
    %v895 = vld [vmem:[#allocation19 + $0x140] sm:$0xff]
    %v896 = vld [vmem:[#allocation19 + $0x148] sm:$0xff]
    %v897 = vld [vmem:[#allocation19 + $0x150] sm:$0xff]
    %v898 = vld [vmem:[#allocation19 + $0x158] sm:$0xff]
    %v899 = vld [vmem:[#allocation19 + $0x160] sm:$0xff]
    %v900 = vld [vmem:[#allocation19 + $0x168] sm:$0xff]
    %v901 = vld [vmem:[#allocation19 + $0x170] sm:$0xff]
    %v902 = vld [vmem:[#allocation19 + $0x178] sm:$0xff]
    %v903 = vld [vmem:[#allocation19 + $0x180] sm:$0xff]
    %v904 = vld [vmem:[#allocation19 + $0x188] sm:$0xff]
    %v905 = vld [vmem:[#allocation19 + $0x190] sm:$0xff]
    %v906 = vld [vmem:[#allocation19 + $0x198] sm:$0xff]
    %v907 = vld [vmem:[#allocation19 + $0x1a0] sm:$0xff]
    %v908 = vld [vmem:[#allocation19 + $0x1a8] sm:$0xff]
    %v909 = vld [vmem:[#allocation19 + $0x1b0] sm:$0xff]
    %v910 = vld [vmem:[#allocation19 + $0x1b8] sm:$0xff]
    %v911 = vld [vmem:[#allocation19 + $0x1c0] sm:$0xff]
    %v912 = vld [vmem:[#allocation19 + $0x1c8] sm:$0xff]
    %v913 = vld [vmem:[#allocation19 + $0x1d0] sm:$0xff]
    %v914 = vld [vmem:[#allocation19 + $0x1d8] sm:$0xff]
    %v915 = vld [vmem:[#allocation19 + $0x1e0] sm:$0xff]
    %v916 = vld [vmem:[#allocation19 + $0x1e8] sm:$0xff]
    %v917 = vld [vmem:[#allocation19 + $0x1f0] sm:$0xff]
    %v918 = vld [vmem:[#allocation19 + $0x1f8] sm:$0xff]
    %v919 = vld [vmem:[#allocation21] sm:$0xff]
    %v920 = vld [vmem:[#allocation21 + $0x8] sm:$0xff]
    %v921 = vld [vmem:[#allocation21 + $0x10] sm:$0xff]
    %v922 = vld [vmem:[#allocation21 + $0x18] sm:$0xff]
    %v923 = vld [vmem:[#allocation21 + $0x20] sm:$0xff]
    %v924 = vld [vmem:[#allocation21 + $0x28] sm:$0xff]
    %v925 = vld [vmem:[#allocation21 + $0x30] sm:$0xff]
    %v926 = vld [vmem:[#allocation21 + $0x38] sm:$0xff]
    %v927 = vld [vmem:[#allocation21 + $0x40] sm:$0xff]
    %v928 = vld [vmem:[#allocation21 + $0x48] sm:$0xff]
    %v929 = vld [vmem:[#allocation21 + $0x50] sm:$0xff]
    %v930 = vld [vmem:[#allocation21 + $0x58] sm:$0xff]
    %v931 = vld [vmem:[#allocation21 + $0x60] sm:$0xff]
    %v932 = vld [vmem:[#allocation21 + $0x68] sm:$0xff]
    %v933 = vld [vmem:[#allocation21 + $0x70] sm:$0xff]
    %v934 = vld [vmem:[#allocation21 + $0x78] sm:$0xff]
    %v935 = vld [vmem:[#allocation21 + $0x80] sm:$0xff]
    %v936 = vld [vmem:[#allocation21 + $0x88] sm:$0xff]
    %v937 = vld [vmem:[#allocation21 + $0x90] sm:$0xff]
    %v938 = vld [vmem:[#allocation21 + $0x98] sm:$0xff]
    %v939 = vld [vmem:[#allocation21 + $0xa0] sm:$0xff]
    %v940 = vld [vmem:[#allocation21 + $0xa8] sm:$0xff]
    %v941 = vld [vmem:[#allocation21 + $0xb0] sm:$0xff]
    %v942 = vld [vmem:[#allocation21 + $0xb8] sm:$0xff]
    %v943 = vld [vmem:[#allocation21 + $0xc0] sm:$0xff]
    %v944 = vld [vmem:[#allocation21 + $0xc8] sm:$0xff]
    %v945 = vld [vmem:[#allocation21 + $0xd0] sm:$0xff]
    %v946 = vld [vmem:[#allocation21 + $0xd8] sm:$0xff]
    %v947 = vld [vmem:[#allocation21 + $0xe0] sm:$0xff]
    %v948 = vld [vmem:[#allocation21 + $0xe8] sm:$0xff]
    %v949 = vld [vmem:[#allocation21 + $0xf0] sm:$0xff]
    %v950 = vld [vmem:[#allocation21 + $0xf8] sm:$0xff]
    %v951 = vld [vmem:[#allocation21 + $0x100] sm:$0xff]
    %v952 = vld [vmem:[#allocation21 + $0x108] sm:$0xff]
    %v953 = vld [vmem:[#allocation21 + $0x110] sm:$0xff]
    %v954 = vld [vmem:[#allocation21 + $0x118] sm:$0xff]
    %v955 = vld [vmem:[#allocation21 + $0x120] sm:$0xff]
    %v956 = vld [vmem:[#allocation21 + $0x128] sm:$0xff]
    %v957 = vld [vmem:[#allocation21 + $0x130] sm:$0xff]
    %v958 = vld [vmem:[#allocation21 + $0x138] sm:$0xff]
    %v959 = vld [vmem:[#allocation21 + $0x140] sm:$0xff]
    %v960 = vld [vmem:[#allocation21 + $0x148] sm:$0xff]
    %v961 = vld [vmem:[#allocation21 + $0x150] sm:$0xff]
    %v962 = vld [vmem:[#allocation21 + $0x158] sm:$0xff]
    %v963 = vld [vmem:[#allocation21 + $0x160] sm:$0xff]
    %v964 = vld [vmem:[#allocation21 + $0x168] sm:$0xff]
    %v965 = vld [vmem:[#allocation21 + $0x170] sm:$0xff]
    %v966 = vld [vmem:[#allocation21 + $0x178] sm:$0xff]
    %v967 = vld [vmem:[#allocation21 + $0x180] sm:$0xff]
    %v968 = vld [vmem:[#allocation21 + $0x188] sm:$0xff]
    %v969 = vld [vmem:[#allocation21 + $0x190] sm:$0xff]
    %v970 = vld [vmem:[#allocation21 + $0x198] sm:$0xff]
    %v971 = vld [vmem:[#allocation21 + $0x1a0] sm:$0xff]
    %v972 = vld [vmem:[#allocation21 + $0x1a8] sm:$0xff]
    %v973 = vld [vmem:[#allocation21 + $0x1b0] sm:$0xff]
    %v974 = vld [vmem:[#allocation21 + $0x1b8] sm:$0xff]
    %v975 = vld [vmem:[#allocation21 + $0x1c0] sm:$0xff]
    %v976 = vld [vmem:[#allocation21 + $0x1c8] sm:$0xff]
    %v977 = vld [vmem:[#allocation21 + $0x1d0] sm:$0xff]
    %v978 = vld [vmem:[#allocation21 + $0x1d8] sm:$0xff]
    %v979 = vld [vmem:[#allocation21 + $0x1e0] sm:$0xff]
    %v980 = vld [vmem:[#allocation21 + $0x1e8] sm:$0xff]
    %v981 = vld [vmem:[#allocation21 + $0x1f0] sm:$0xff]
    %v982 = vld [vmem:[#allocation21 + $0x1f8] sm:$0xff]
    %983 = vmatprep.subr.mxu0 %v856
    %984 = vmatpush1.msra.mxu0 %v855
    %985 = vmatprep.subr.mxu0 %v858
    %986 = vmatpush1.msra.mxu0 %v857
    %987 = vmatprep.subr.mxu0 %v860
    %988 = vmatpush1.msra.mxu0 %v859
    %989 = vmatprep.subr.mxu0 %v862
    %990 = vmatpush1.msra.mxu0 %v861
    %991 = vmatprep.subr.mxu0 %v864
    %992 = vmatpush1.msra.mxu0 %v863
    %993 = vmatprep.subr.mxu0 %v866
    %994 = vmatpush1.msra.mxu0 %v865
    %995 = vmatprep.subr.mxu0 %v868
    %996 = vmatpush1.msra.mxu0 %v867
    %997 = vmatprep.subr.mxu0 %v870
    %998 = vmatpush1.msra.mxu0 %v869
    %999 = vmatprep.subr.mxu0 %v872
    %1000 = vmatpush1.msra.mxu0 %v871
    %1001 = vmatprep.subr.mxu0 %v874
    %1002 = vmatpush1.msra.mxu0 %v873
    %1003 = vmatprep.subr.mxu0 %v876
    %1004 = vmatpush1.msra.mxu0 %v875
    %1005 = vmatprep.subr.mxu0 %v878
    %1006 = vmatpush1.msra.mxu0 %v877
    %1007 = vmatprep.subr.mxu0 %v880
    %1008 = vmatpush1.msra.mxu0 %v879
    %1009 = vmatprep.subr.mxu0 %v882
    %1010 = vmatpush1.msra.mxu0 %v881
    %1011 = vmatprep.subr.mxu0 %v884
    %1012 = vmatpush1.msra.mxu0 %v883
    %1013 = vmatprep.subr.mxu0 %v886
    %1014 = vmatpush1.msra.mxu0 %v885
    %1015 = vmatprep.subr.mxu0 %v888
    %1016 = vmatpush1.msra.mxu0 %v887
    %1017 = vmatprep.subr.mxu0 %v890
    %1018 = vmatpush1.msra.mxu0 %v889
    %1019 = vmatprep.subr.mxu0 %v892
    %1020 = vmatpush1.msra.mxu0 %v891
    %1021 = vmatprep.subr.mxu0 %v894
    %1022 = vmatpush1.msra.mxu0 %v893
    %1023 = vmatprep.subr.mxu0 %v896
    %1024 = vmatpush1.msra.mxu0 %v895
    %1025 = vmatprep.subr.mxu0 %v898
    %1026 = vmatpush1.msra.mxu0 %v897
    %1027 = vmatprep.subr.mxu0 %v900
    %1028 = vmatpush1.msra.mxu0 %v899
    %1029 = vmatprep.subr.mxu0 %v902
    %1030 = vmatpush1.msra.mxu0 %v901
    %1031 = vmatprep.subr.mxu0 %v904
    %1032 = vmatpush1.msra.mxu0 %v903
    %1033 = vmatprep.subr.mxu0 %v906
    %1034 = vmatpush1.msra.mxu0 %v905
    %1035 = vmatprep.subr.mxu0 %v908
    %1036 = vmatpush1.msra.mxu0 %v907
    %1037 = vmatprep.subr.mxu0 %v910
    %1038 = vmatpush1.msra.mxu0 %v909
    %1039 = vmatprep.subr.mxu0 %v912
    %1040 = vmatpush1.msra.mxu0 %v911
    %1041 = vmatprep.subr.mxu0 %v914
    %1042 = vmatpush1.msra.mxu0 %v913
    %1043 = vmatprep.subr.mxu0 %v916
    %1044 = vmatpush1.msra.mxu0 %v915
    %1045 = vmatprep.subr.mxu0 %v918
    %1046 = vmatpush1.msra.mxu0 %v917
    %1047 = vmatprep.mubr.f32.mxu0 %v824
    %1048 = vmatmul.mubr.f32.gmra.mrb[0].mxu0 %v823
    %v1049 = vpop.f32.mrb[0].mxu0
    %v1050 = vadd.f32 0.0, %v1049
    %v1051 = vpop.f32.mrb[0].mxu0
    %v1052 = vadd.f32 0.0, %v1051
    %1053 = vmatprep.mubr.f32.mxu0 %v826
    %1054 = vmatmul.mubr.f32.gmra.mrb[0].mxu0 %v825
    %v1055 = vpop.f32.mrb[0].mxu0
    %v1056 = vadd.f32 0.0, %v1055
    %v1057 = vpop.f32.mrb[0].mxu0
    %v1058 = vadd.f32 0.0, %v1057
    %1059 = vmatprep.mubr.f32.mxu0 %v828
    %1060 = vmatmul.mubr.f32.gmra.mrb[0].mxu0 %v827
    %v1061 = vpop.f32.mrb[0].mxu0
    %v1062 = vadd.f32 0.0, %v1061
    %v1063 = vpop.f32.mrb[0].mxu0
    %v1064 = vadd.f32 0.0, %v1063
    %1065 = vmatprep.mubr.f32.mxu0 %v830
    %1066 = vmatmul.mubr.f32.gmra.mrb[0].mxu0 %v829
    %v1067 = vpop.f32.mrb[0].mxu0
    %v1068 = vadd.f32 0.0, %v1067
    %v1069 = vpop.f32.mrb[0].mxu0
    %v1070 = vadd.f32 0.0, %v1069
    %1071 = vdwg.mxu0
    %1072 = vmatprep.subr.mxu0 %v920
    %1073 = vmatpush1.msra.mxu0 %v919
    %1074 = vmatprep.subr.mxu0 %v922
    %1075 = vmatpush1.msra.mxu0 %v921
    %1076 = vmatprep.subr.mxu0 %v924
    %1077 = vmatpush1.msra.mxu0 %v923
    %1078 = vmatprep.subr.mxu0 %v926
    %1079 = vmatpush1.msra.mxu0 %v925
    %1080 = vmatprep.subr.mxu0 %v928
    %1081 = vmatpush1.msra.mxu0 %v927
    %1082 = vmatprep.subr.mxu0 %v930
    %1083 = vmatpush1.msra.mxu0 %v929
    %1084 = vmatprep.subr.mxu0 %v932
    %1085 = vmatpush1.msra.mxu0 %v931
    %1086 = vmatprep.subr.mxu0 %v934
    %1087 = vmatpush1.msra.mxu0 %v933
    %1088 = vmatprep.subr.mxu0 %v936
    %1089 = vmatpush1.msra.mxu0 %v935
    %1090 = vmatprep.subr.mxu0 %v938
    %1091 = vmatpush1.msra.mxu0 %v937
    %1092 = vmatprep.subr.mxu0 %v940
    %1093 = vmatpush1.msra.mxu0 %v939
    %1094 = vmatprep.subr.mxu0 %v942
    %1095 = vmatpush1.msra.mxu0 %v941
    %1096 = vmatprep.subr.mxu0 %v944
    %1097 = vmatpush1.msra.mxu0 %v943
    %1098 = vmatprep.subr.mxu0 %v946
    %1099 = vmatpush1.msra.mxu0 %v945
    %1100 = vmatprep.subr.mxu0 %v948
    %1101 = vmatpush1.msra.mxu0 %v947
    %1102 = vmatprep.subr.mxu0 %v950
    %1103 = vmatpush1.msra.mxu0 %v949
    %1104 = vmatprep.subr.mxu0 %v952
    %1105 = vmatpush1.msra.mxu0 %v951
    %1106 = vmatprep.subr.mxu0 %v954
    %1107 = vmatpush1.msra.mxu0 %v953
    %1108 = vmatprep.subr.mxu0 %v956
    %1109 = vmatpush1.msra.mxu0 %v955
    %1110 = vmatprep.subr.mxu0 %v958
    %1111 = vmatpush1.msra.mxu0 %v957
    %1112 = vmatprep.subr.mxu0 %v960
    %1113 = vmatpush1.msra.mxu0 %v959
    %1114 = vmatprep.subr.mxu0 %v962
    %1115 = vmatpush1.msra.mxu0 %v961
    %1116 = vmatprep.subr.mxu0 %v964
    %1117 = vmatpush1.msra.mxu0 %v963
    %1118 = vmatprep.subr.mxu0 %v966
    %1119 = vmatpush1.msra.mxu0 %v965
    %1120 = vmatprep.subr.mxu0 %v968
    %1121 = vmatpush1.msra.mxu0 %v967
    %1122 = vmatprep.subr.mxu0 %v970
    %1123 = vmatpush1.msra.mxu0 %v969
    %1124 = vmatprep.subr.mxu0 %v972
    %1125 = vmatpush1.msra.mxu0 %v971
    %1126 = vmatprep.subr.mxu0 %v974
    %1127 = vmatpush1.msra.mxu0 %v973
    %1128 = vmatprep.subr.mxu0 %v976
    %1129 = vmatpush1.msra.mxu0 %v975
    %1130 = vmatprep.subr.mxu0 %v978
    %1131 = vmatpush1.msra.mxu0 %v977
    %1132 = vmatprep.subr.mxu0 %v980
    %1133 = vmatpush1.msra.mxu0 %v979
    %1134 = vmatprep.subr.mxu0 %v982
    %1135 = vmatpush1.msra.mxu0 %v981
    %1136 = vmatprep.mubr.f32.mxu0 %v848
    %1137 = vmatmul.mubr.f32.gmra.mrb[0].mxu0 %v847
    %v1138 = vpop.f32.mrb[0].mxu0
    %v1139 = vadd.f32 0.0, %v1138
    %v1140 = vpop.f32.mrb[0].mxu0
    %v1141 = vadd.f32 0.0, %v1140
    %1142 = vmatprep.mubr.f32.mxu0 %v850
    %1143 = vmatmul.mubr.f32.gmra.mrb[0].mxu0 %v849
    %v1144 = vpop.f32.mrb[0].mxu0
    %v1145 = vadd.f32 0.0, %v1144
    %v1146 = vpop.f32.mrb[0].mxu0
    %v1147 = vadd.f32 0.0, %v1146
    %1148 = vmatprep.mubr.f32.mxu0 %v852
    %1149 = vmatmul.mubr.f32.gmra.mrb[0].mxu0 %v851
    %v1150 = vpop.f32.mrb[0].mxu0
    %v1151 = vadd.f32 0.0, %v1150
    %v1152 = vpop.f32.mrb[0].mxu0
    %v1153 = vadd.f32 0.0, %v1152
    %1154 = vmatprep.mubr.f32.mxu0 %v854
    %1155 = vmatmul.mubr.f32.gmra.mrb[0].mxu0 %v853
    %v1156 = vpop.f32.mrb[0].mxu0
    %v1157 = vadd.f32 0.0, %v1156
    %v1158 = vpop.f32.mrb[0].mxu0
    %v1159 = vadd.f32 0.0, %v1158
    %1160 = vdwg.mxu0
    %v1161 = vsub.f32 %v1050, %v1139
    %v1162 = vsub.f32 %v1052, %v1141
    %v1163 = vsub.f32 %v1056, %v1145
    %v1164 = vsub.f32 %v1058, %v1147
    %v1165 = vsub.f32 %v1062, %v1151
    %v1166 = vsub.f32 %v1064, %v1153
    %v1167 = vsub.f32 %v1068, %v1157
    %v1168 = vsub.f32 %v1070, %v1159
    %1169 = vmatprep.subr.mxu0 %v856
    %1170 = vmatpush1.msra.mxu0 %v855
    %1171 = vmatprep.subr.mxu0 %v858
    %1172 = vmatpush1.msra.mxu0 %v857
    %1173 = vmatprep.subr.mxu0 %v860
    %1174 = vmatpush1.msra.mxu0 %v859
    %1175 = vmatprep.subr.mxu0 %v862
    %1176 = vmatpush1.msra.mxu0 %v861
    %1177 = vmatprep.subr.mxu0 %v864
    %1178 = vmatpush1.msra.mxu0 %v863
    %1179 = vmatprep.subr.mxu0 %v866
    %1180 = vmatpush1.msra.mxu0 %v865
    %1181 = vmatprep.subr.mxu0 %v868
    %1182 = vmatpush1.msra.mxu0 %v867
    %1183 = vmatprep.subr.mxu0 %v870
    %1184 = vmatpush1.msra.mxu0 %v869
    %1185 = vmatprep.subr.mxu0 %v872
    %1186 = vmatpush1.msra.mxu0 %v871
    %1187 = vmatprep.subr.mxu0 %v874
    %1188 = vmatpush1.msra.mxu0 %v873
    %1189 = vmatprep.subr.mxu0 %v876
    %1190 = vmatpush1.msra.mxu0 %v875
    %1191 = vmatprep.subr.mxu0 %v878
    %1192 = vmatpush1.msra.mxu0 %v877
    %1193 = vmatprep.subr.mxu0 %v880
    %1194 = vmatpush1.msra.mxu0 %v879
    %1195 = vmatprep.subr.mxu0 %v882
    %1196 = vmatpush1.msra.mxu0 %v881
    %1197 = vmatprep.subr.mxu0 %v884
    %1198 = vmatpush1.msra.mxu0 %v883
    %1199 = vmatprep.subr.mxu0 %v886
    %1200 = vmatpush1.msra.mxu0 %v885
    %1201 = vmatprep.subr.mxu0 %v888
    %1202 = vmatpush1.msra.mxu0 %v887
    %1203 = vmatprep.subr.mxu0 %v890
    %1204 = vmatpush1.msra.mxu0 %v889
    %1205 = vmatprep.subr.mxu0 %v892
    %1206 = vmatpush1.msra.mxu0 %v891
    %1207 = vmatprep.subr.mxu0 %v894
    %1208 = vmatpush1.msra.mxu0 %v893
    %1209 = vmatprep.subr.mxu0 %v896
    %1210 = vmatpush1.msra.mxu0 %v895
    %1211 = vmatprep.subr.mxu0 %v898
    %1212 = vmatpush1.msra.mxu0 %v897
    %1213 = vmatprep.subr.mxu0 %v900
    %1214 = vmatpush1.msra.mxu0 %v899
    %1215 = vmatprep.subr.mxu0 %v902
    %1216 = vmatpush1.msra.mxu0 %v901
    %1217 = vmatprep.subr.mxu0 %v904
    %1218 = vmatpush1.msra.mxu0 %v903
    %1219 = vmatprep.subr.mxu0 %v906
    %1220 = vmatpush1.msra.mxu0 %v905
    %1221 = vmatprep.subr.mxu0 %v908
    %1222 = vmatpush1.msra.mxu0 %v907
    %1223 = vmatprep.subr.mxu0 %v910
    %1224 = vmatpush1.msra.mxu0 %v909
    %1225 = vmatprep.subr.mxu0 %v912
    %1226 = vmatpush1.msra.mxu0 %v911
    %1227 = vmatprep.subr.mxu0 %v914
    %1228 = vmatpush1.msra.mxu0 %v913
    %1229 = vmatprep.subr.mxu0 %v916
    %1230 = vmatpush1.msra.mxu0 %v915
    %1231 = vmatprep.subr.mxu0 %v918
    %1232 = vmatpush1.msra.mxu0 %v917
    %1233 = vmatprep.mubr.f32.mxu0 %v848
    %1234 = vmatmul.mubr.f32.gmra.mrb[0].mxu0 %v847
    %v1235 = vpop.f32.mrb[0].mxu0
    %v1236 = vadd.f32 0.0, %v1235
    %v1237 = vpop.f32.mrb[0].mxu0
    %v1238 = vadd.f32 0.0, %v1237
    %1239 = vmatprep.mubr.f32.mxu0 %v850
    %1240 = vmatmul.mubr.f32.gmra.mrb[0].mxu0 %v849
    %v1241 = vpop.f32.mrb[0].mxu0
    %v1242 = vadd.f32 0.0, %v1241
    %v1243 = vpop.f32.mrb[0].mxu0
    %v1244 = vadd.f32 0.0, %v1243
    %1245 = vmatprep.mubr.f32.mxu0 %v852
    %1246 = vmatmul.mubr.f32.gmra.mrb[0].mxu0 %v851
    %v1247 = vpop.f32.mrb[0].mxu0
    %v1248 = vadd.f32 0.0, %v1247
    %v1249 = vpop.f32.mrb[0].mxu0
    %v1250 = vadd.f32 0.0, %v1249
    %1251 = vmatprep.mubr.f32.mxu0 %v854
    %1252 = vmatmul.mubr.f32.gmra.mrb[0].mxu0 %v853
    %v1253 = vpop.f32.mrb[0].mxu0
    %v1254 = vadd.f32 0.0, %v1253
    %v1255 = vpop.f32.mrb[0].mxu0
    %v1256 = vadd.f32 0.0, %v1255
    %1257 = vdwg.mxu0
    %1258 = vmatprep.subr.mxu0 %v920
    %1259 = vmatpush1.msra.mxu0 %v919
    %1260 = vmatprep.subr.mxu0 %v922
    %1261 = vmatpush1.msra.mxu0 %v921
    %1262 = vmatprep.subr.mxu0 %v924
    %1263 = vmatpush1.msra.mxu0 %v923
    %1264 = vmatprep.subr.mxu0 %v926
    %1265 = vmatpush1.msra.mxu0 %v925
    %1266 = vmatprep.subr.mxu0 %v928
    %1267 = vmatpush1.msra.mxu0 %v927
    %1268 = vmatprep.subr.mxu0 %v930
    %1269 = vmatpush1.msra.mxu0 %v929
    %1270 = vmatprep.subr.mxu0 %v932
    %1271 = vmatpush1.msra.mxu0 %v931
    %1272 = vmatprep.subr.mxu0 %v934
    %1273 = vmatpush1.msra.mxu0 %v933
    %1274 = vmatprep.subr.mxu0 %v936
    %1275 = vmatpush1.msra.mxu0 %v935
    %1276 = vmatprep.subr.mxu0 %v938
    %1277 = vmatpush1.msra.mxu0 %v937
    %1278 = vmatprep.subr.mxu0 %v940
    %1279 = vmatpush1.msra.mxu0 %v939
    %1280 = vmatprep.subr.mxu0 %v942
    %1281 = vmatpush1.msra.mxu0 %v941
    %1282 = vmatprep.subr.mxu0 %v944
    %1283 = vmatpush1.msra.mxu0 %v943
    %1284 = vmatprep.subr.mxu0 %v946
    %1285 = vmatpush1.msra.mxu0 %v945
    %1286 = vmatprep.subr.mxu0 %v948
    %1287 = vmatpush1.msra.mxu0 %v947
    %1288 = vmatprep.subr.mxu0 %v950
    %1289 = vmatpush1.msra.mxu0 %v949
    %1290 = vmatprep.subr.mxu0 %v952
    %1291 = vmatpush1.msra.mxu0 %v951
    %1292 = vmatprep.subr.mxu0 %v954
    %1293 = vmatpush1.msra.mxu0 %v953
    %1294 = vmatprep.subr.mxu0 %v956
    %1295 = vmatpush1.msra.mxu0 %v955
    %1296 = vmatprep.subr.mxu0 %v958
    %1297 = vmatpush1.msra.mxu0 %v957
    %1298 = vmatprep.subr.mxu0 %v960
    %1299 = vmatpush1.msra.mxu0 %v959
    %1300 = vmatprep.subr.mxu0 %v962
    %1301 = vmatpush1.msra.mxu0 %v961
    %1302 = vmatprep.subr.mxu0 %v964
    %1303 = vmatpush1.msra.mxu0 %v963
    %1304 = vmatprep.subr.mxu0 %v966
    %1305 = vmatpush1.msra.mxu0 %v965
    %1306 = vmatprep.subr.mxu0 %v968
    %1307 = vmatpush1.msra.mxu0 %v967
    %1308 = vmatprep.subr.mxu0 %v970
    %1309 = vmatpush1.msra.mxu0 %v969
    %1310 = vmatprep.subr.mxu0 %v972
    %1311 = vmatpush1.msra.mxu0 %v971
    %1312 = vmatprep.subr.mxu0 %v974
    %1313 = vmatpush1.msra.mxu0 %v973
    %1314 = vmatprep.subr.mxu0 %v976
    %1315 = vmatpush1.msra.mxu0 %v975
    %1316 = vmatprep.subr.mxu0 %v978
    %1317 = vmatpush1.msra.mxu0 %v977
    %1318 = vmatprep.subr.mxu0 %v980
    %1319 = vmatpush1.msra.mxu0 %v979
    %1320 = vmatprep.subr.mxu0 %v982
    %1321 = vmatpush1.msra.mxu0 %v981
    %1322 = vmatprep.mubr.f32.mxu0 %v824
    %1323 = vmatmul.mubr.f32.gmra.mrb[0].mxu0 %v823
    %v1324 = vpop.f32.mrb[0].mxu0
    %v1325 = vadd.f32 %v1236, %v1324
    %v1326 = vpop.f32.mrb[0].mxu0
    %v1327 = vadd.f32 %v1238, %v1326
    %1328 = vmatprep.mubr.f32.mxu0 %v826
    %1329 = vmatmul.mubr.f32.gmra.mrb[0].mxu0 %v825
    %v1330 = vpop.f32.mrb[0].mxu0
    %v1331 = vadd.f32 %v1242, %v1330
    %v1332 = vpop.f32.mrb[0].mxu0
    %v1333 = vadd.f32 %v1244, %v1332
    %1334 = vmatprep.mubr.f32.mxu0 %v828
    %1335 = vmatmul.mubr.f32.gmra.mrb[0].mxu0 %v827
    %v1336 = vpop.f32.mrb[0].mxu0
    %v1337 = vadd.f32 %v1248, %v1336
    %v1338 = vpop.f32.mrb[0].mxu0
    %v1339 = vadd.f32 %v1250, %v1338
    %1340 = vmatprep.mubr.f32.mxu0 %v830
    %1341 = vmatmul.mubr.f32.gmra.mrb[0].mxu0 %v829
    %v1342 = vpop.f32.mrb[0].mxu0
    %v1343 = vadd.f32 %v1254, %v1342
    %v1344 = vpop.f32.mrb[0].mxu0
    %v1345 = vadd.f32 %v1256, %v1344
    %1346 = vdwg.mxu0
    %v1347 = vmul.f32 %v1161, %v235
    %v1348 = vmul.f32 %v1162, %v236
    %v1349 = vmul.f32 %v1325, %v243
    %v1350 = vmul.f32 %v1327, %v244
    %v1351 = vadd.f32 %v1347, %v1349
    %v1352 = vadd.f32 %v1348, %v1350
    %v1353 = vmul.f32 %v1325, %v235
    %v1354 = vmul.f32 %v1327, %v236
    %v1355 = vmul.f32 %v1161, %v243
    %v1356 = vmul.f32 %v1162, %v244
    %v1357 = vsub.f32 %v1353, %v1355
    %v1358 = vsub.f32 %v1354, %v1356
    %v1359 = vmul.f32 %v1163, %v237
    %v1360 = vmul.f32 %v1164, %v238
    %v1361 = vmul.f32 %v1331, %v245
    %v1362 = vmul.f32 %v1333, %v246
    %v1363 = vadd.f32 %v1359, %v1361
    %v1364 = vadd.f32 %v1360, %v1362
    %v1365 = vmul.f32 %v1331, %v237
    %v1366 = vmul.f32 %v1333, %v238
    %v1367 = vmul.f32 %v1163, %v245
    %v1368 = vmul.f32 %v1164, %v246
    %v1369 = vsub.f32 %v1365, %v1367
    %v1370 = vsub.f32 %v1366, %v1368
    %v1371 = vadd.f32 %v1351, %v1363
    %v1372 = vadd.f32 %v1352, %v1364
    %v1373 = vadd.f32 %v1357, %v1369
    %v1374 = vadd.f32 %v1358, %v1370
    %v1375 = vmul.f32 %v1165, %v239
    %v1376 = vmul.f32 %v1166, %v240
    %v1377 = vmul.f32 %v1337, %v247
    %v1378 = vmul.f32 %v1339, %v248
    %v1379 = vadd.f32 %v1375, %v1377
    %v1380 = vadd.f32 %v1376, %v1378
    %v1381 = vmul.f32 %v1337, %v239
    %v1382 = vmul.f32 %v1339, %v240
    %v1383 = vmul.f32 %v1165, %v247
    %v1384 = vmul.f32 %v1166, %v248
    %v1385 = vsub.f32 %v1381, %v1383
    %v1386 = vsub.f32 %v1382, %v1384
    %v1387 = vadd.f32 %v1371, %v1379
    %v1388 = vadd.f32 %v1372, %v1380
    %v1389 = vadd.f32 %v1373, %v1385
    %v1390 = vadd.f32 %v1374, %v1386
    %v1391 = vmul.f32 %v1167, %v241
    %v1392 = vmul.f32 %v1168, %v242
    %v1393 = vmul.f32 %v1343, %v249
    %v1394 = vmul.f32 %v1345, %v250
    %v1395 = vadd.f32 %v1391, %v1393
    %v1396 = vadd.f32 %v1392, %v1394
    %v1397 = vmul.f32 %v1343, %v241
    %v1398 = vmul.f32 %v1345, %v242
    %v1399 = vmul.f32 %v1167, %v249
    %v1400 = vmul.f32 %v1168, %v250
    %v1401 = vsub.f32 %v1397, %v1399
    %v1402 = vsub.f32 %v1398, %v1400
    %v1403 = vadd.f32 %v1387, %v1395
    %v1404 = vadd.f32 %v1388, %v1396
    %v1405 = vadd.f32 %v1389, %v1401
    %v1406 = vadd.f32 %v1390, %v1402
    %v1407 = vmul.f32 %v1403, 2.0
    %v1408 = vmul.f32 %v1404, 2.0
    %v1409 = vstv %s200
    %v1410 = vmul.f32 %v1409, %v222
    %v1411 = vmul.f32 %v1409, %v223
    %v1412 = vadd.f32 %v1407, %v1410
    %v1413 = vadd.f32 %v1408, %v1411
    %v1414 = vstv %s199
    %v1415 = vmul.f32 %v1414, %v1412
    %v1416 = vmul.f32 %v1414, %v1413
    %v1417 = vsub.f32 %v207, %v1415
    %v1418 = vsub.f32 %v208, %v1416
    %1419 = vst [vmem:[#allocation22] sm:$0xff] %v1417
    %1420 = vst [vmem:[#allocation22 + $0x8] sm:$0xff] %v1418
    %v1421 = vmul.f32 %v1405, 2.0
    %v1422 = vmul.f32 %v1406, 2.0
    %v1423 = vmul.f32 %v1409, %v233
    %v1424 = vmul.f32 %v1409, %v234
    %v1425 = vadd.f32 %v1421, %v1423
    %v1426 = vadd.f32 %v1422, %v1424
    %v1427 = vmul.f32 %v1414, %v1425
    %v1428 = vmul.f32 %v1414, %v1426
    %v1429 = vsub.f32 %v209, %v1427
    %v1430 = vsub.f32 %v210, %v1428
    %1431 = vst [vmem:[#allocation23] sm:$0xff] %v1429
    %1432 = vst [vmem:[#allocation23 + $0x8] sm:$0xff] %v1430
    // Predicated region
    $region98: #{tpu_custom_call.1} parent=1 // pred_check
      _
    $region99: #{tpu_custom_call.1} parent=1 // pred_check_branch
      %1434 = sbr.rel (0) target = $region101
    $region100: #{tpu_custom_call.1} parent=1 // pred_region
      %s1436 = ssub.s32 256, 256
      %1437 = vsyncadd [#allocation4], %s1436
      %s1439 = sshll.u32 [#allocation22], 4
      %s1440 = int_to_ptr.vmem [resolvable:$true] %s1439
      %1442 = dma.vmem_to_hbm [thread:$0]  %s1440, 256, %s12, [#allocation4]
    $region101: #{tpu_custom_call.1} parent=1 // pred_fallthru
      _
    // Predicated region
    $region102: #{tpu_custom_call.1} parent=1 // pred_check
      _
    $region103: #{tpu_custom_call.1} parent=1 // pred_check_branch
      %1444 = sbr.rel (0) target = $region105
    $region104: #{tpu_custom_call.1} parent=1 // pred_region
      %s1446 = ssub.s32 256, 256
      %1447 = vsyncadd [#allocation24], %s1446
      %s1449 = sshll.u32 [#allocation23], 4
      %s1450 = int_to_ptr.vmem [resolvable:$true] %s1449
      %1452 = dma.vmem_to_hbm [thread:$0]  %s1450, 256, %s13, [#allocation24]
    $region105: #{tpu_custom_call.1} parent=1 // pred_fallthru
      _
    // Predicated region
    $region106: #{tpu_custom_call.1} parent=1 // pred_check
      _
    $region107: #{tpu_custom_call.1} parent=1 // pred_check_branch
      %1454 = sbr.rel (0) target = $region109
    $region108: #{tpu_custom_call.1} parent=1 // pred_region
      %1455 = dma.done [#allocation4], 256
    $region109: #{tpu_custom_call.1} parent=1 // pred_fallthru
      _
    // Predicated region
    $region110: #{tpu_custom_call.1} parent=1 // pred_check
      _
    $region111: #{tpu_custom_call.1} parent=1 // pred_check_branch
      %1457 = sbr.rel (0) target = $region113
    $region112: #{tpu_custom_call.1} parent=1 // pred_region
      %1458 = dma.done [#allocation24], 256
    $region113: #{tpu_custom_call.1} parent=1 // pred_fallthru
      _
    %1459 = vsyncpa [#allocation3], 1
    %1460 = vsyncpa [#allocation8], 1
    %1461 = vsyncpa [#allocation11], 1
    %1462 = vsyncpa [#allocation14], 1
    %1463 = vsyncpa [#allocation17], 1
    %1464 = vsyncpa [#allocation20], 1
    %1465 = vsyncpa [#allocation4], 1
    %1466 = vsyncpa [#allocation24], 1
    %1467 = vsyncpa [#allocation5], 1

</llo_original>
